<compile_context>
chip_gen: v6e
topology: v6e:2x2x1
jax: 0.10.0
libtpu: 0.0.40
codegen_flags: <defaults>
</compile_context>

<pallas_src>
import functools

import jax
import jax.numpy as jnp
import numpy as np
from jax.experimental import pallas as pl
from jax.experimental.pallas import tpu as pltpu

KH = KW = 3  # 3x3 conv, stride=1, padding=1


def _conv3x3_row_kernel(x_ref, w_ref, b_ref, o_ref, *, H):
    # x_ref : (MB, W*Cin)           MB = NB*H rows, one row per (sample, h)
    # w_ref : (KH, W*Cin, W*Cout)   banded weights (kw taps + W zero-pad folded in)
    # b_ref : (1, W*Cout)           bias tiled across W
    # o_ref : (MB, W*Cout)          lane-dense output slab
    MB = x_ref.shape[0]
    x = x_ref[...]

    # Per-row h index within each sample; used to zero the H-padding rows.
    h_idx = jax.lax.broadcasted_iota(jnp.int32, (MB, 1), 0) % H

    # Center tap (kh = 1) first, then consume each shifted operand eagerly.
    acc = jnp.dot(x, w_ref[1], preferred_element_type=jnp.float32)

    # kh = 0 tap needs row h-1 (zero at h == 0): roll down by 1 + mask.
    x_dn = pltpu.roll(x, shift=1, axis=0) * (h_idx != 0).astype(x.dtype)
    acc = acc + jnp.dot(x_dn, w_ref[0], preferred_element_type=jnp.float32)

    # kh = 2 tap needs row h+1 (zero at h == H-1): roll up by 1 + mask.
    x_up = pltpu.roll(x, shift=MB - 1, axis=0) * (h_idx != H - 1).astype(x.dtype)
    acc = acc + jnp.dot(x_up, w_ref[2], preferred_element_type=jnp.float32)

    o_ref[...] = (acc + b_ref[...]).astype(o_ref.dtype)


def _build_banded_weights(w_hwio, W):
    """(KH, KW, Cin, Cout) -> (KH, W*Cin, W*Cout) banded matrices.

    band[kh, w_in*Cin+cin, w_out*Cout+cout] = w[kh, w_in-w_out+1, cin, cout]
    if 0 <= w_in-w_out+1 < KW (zero otherwise) -> implements the kw taps and
    padding=1 along W.
    """
    KH_, KW_, Cin, Cout = w_hwio.shape
    pad = (KW_ - 1) // 2
    r = jnp.arange(W)[:, None]          # input pixel index  (w_in)
    c = jnp.arange(W)[None, :]          # output pixel index (w_out)
    kw = r - c + pad                    # tap index for this (input, output) pair
    valid = (kw >= 0) & (kw < KW_)
    kw_c = jnp.clip(kw, 0, KW_ - 1)
    blocks = w_hwio[:, kw_c]                                    # (KH, W, W, Cin, Cout)
    blocks = jnp.where(valid[None, :, :, None, None], blocks, 0.0)
    blocks = jnp.transpose(blocks, (0, 1, 3, 2, 4))             # (KH, W, Cin, W, Cout)
    return blocks.reshape(KH_, W * Cin, W * Cout)


@functools.partial(jax.jit, static_argnames=("num_blocks",))
def seq_to_ann_container(x_seq, w_hwio, bias, *, num_blocks=1):
    """SeqToANNContainer.forward semantics with a Conv2d(3x3, pad=1) inner module.

    x_seq : (T, B, Cin, H, W)  [PyTorch NCHW per time step]
    returns: (T, B, Cout, H, W)

    num_blocks: grid steps. Default 1 (best for single-TC v5e/v6e); pass 2 on
    v7x to shard the "parallel" axis over both TensorCores if profiling shows
    the split lands on both cores.
    """
    T, B, Cin, H, W = x_seq.shape
    Cout = w_hwio.shape[-1]
    N = T * B
    assert N % num_blocks == 0
    MB = (N // num_blocks) * H          # rows per grid step

    # flatten(0,1) and go to a lane-friendly row layout: (N*H, W*Cin).
    # allow_input_fusion lets XLA fuse this transpose into the pallas_call input
    # fetch instead of a separate HBM round trip (falls back gracefully if not).
    x_rows = jnp.transpose(x_seq.reshape(N, Cin, H, W), (0, 2, 3, 1))
    x_rows = x_rows.reshape(N * H, W * Cin)

    w_band = _build_banded_weights(w_hwio, W)           # (KH, W*Cin, W*Cout)
    b_tiled = jnp.tile(bias, W).reshape(1, W * Cout)    # (1, W*Cout)

    kernel = functools.partial(_conv3x3_row_kernel, H=H)

    y_rows = pl.pallas_call(
        kernel,
        out_shape=jax.ShapeDtypeStruct((N * H, W * Cout), x_seq.dtype),
        grid_spec=pltpu.PrefetchScalarGridSpec(
            num_scalar_prefetch=0,
            grid=(num_blocks,),
            in_specs=[
                pl.BlockSpec((MB, W * Cin), lambda n: (n, 0)),
                pl.BlockSpec((KH, W * Cin, W * Cout), lambda n: (0, 0, 0)),
                pl.BlockSpec((1, W * Cout), lambda n: (0, 0)),
            ],
            out_specs=pl.BlockSpec((MB, W * Cout), lambda n: (n, 0)),
        ),
        compiler_params=pltpu.CompilerParams(
            dimension_semantics=("parallel",),
            allow_input_fusion=[True, False, False],
        ),
    )(x_rows, w_band, b_tiled)

    # (N*H, W*Cout) -> (T, B, Cout, H, W)
    # TODO(synk): keep activations in the (N*H, W*C) row layout across the whole
    # TAB/LIF stack to avoid this layout round trip per layer.
    y = y_rows.reshape(N, H, W, Cout).transpose(0, 3, 1, 2)
    return y.reshape(T, B, Cout, H, W)


if __name__ == "__main__":
    T, B, C_in, H, W = 8, 2, 4, 16, 16
    C_out = 8

    key = jax.random.PRNGKey(0)
    kx, kw_key, kb_key = jax.random.split(key, 3)

    x_seq = jax.random.normal(kx, (T, B, C_in, H, W), dtype=jnp.float32)
    # Deterministic synthetic parameters (nn.Conv2d(C_in, C_out, 3, padding=1)).
    # Stored as HWIO; equivalent to PyTorch's OIHW weight. (Conv_TAB_Layer uses
    # bias=False — pass zeros for the bias in that case.)
    w_hwio = (jax.random.normal(kw_key, (KH, KW, C_in, C_out), dtype=jnp.float32)
              * 0.1)
    bias = jax.random.normal(kb_key, (C_out,), dtype=jnp.float32) * 0.1

    y = seq_to_ann_container(x_seq, w_hwio, bias)
    y = jax.block_until_ready(y)
    assert y.shape == (T, B, C_out, H, W)

    # Sanity check against XLA's reference convolution (same semantics).
    x_flat_nhwc = jnp.transpose(x_seq.reshape(T * B, C_in, H, W), (0, 2, 3, 1))
    y_ref_nhwc = jax.lax.conv_general_dilated(
        x_flat_nhwc, w_hwio, window_strides=(1, 1), padding="SAME",
        dimension_numbers=("NHWC", "HWIO", "NHWC"),
    ) + bias[None, None, None, :]
    y_ref = jnp.transpose(y_ref_nhwc, (0, 3, 1, 2)).reshape(T, B, C_out, H, W)
    np.testing.assert_allclose(np.asarray(y), np.asarray(y_ref),
                               rtol=1e-4, atol=1e-4)

    print("KERNEL_OK")
</pallas_src>

<mosaic_0001>
module attributes {stable_mosaic.version = 11 : i64} {
  func.func @_conv3x3_row_kernel(%arg0: i32, %arg1: memref<256x64xf32, #tpu.memory_space<vmem>>, %arg2: memref<3x64x128xf32, #tpu.memory_space<vmem>>, %arg3: memref<1x128xf32, #tpu.memory_space<vmem>>, %arg4: memref<256x128xf32, #tpu.memory_space<vmem>>) attributes {dimension_semantics = [#tpu.dimension_semantics<parallel>], iteration_bounds = array<i64: 1>, scalar_prefetch = 0 : i64, scratch_operands = 0 : i64, tpu.core_type = #tpu.core_type<tc>, window_params = [{transform_indices = @transform_0, window_bounds = array<i64: 256, 64>}, {pipeline_mode = #tpu.pipeline_mode<synchronous>, transform_indices = @transform_1, window_bounds = array<i64: 3, 64, 128>}, {pipeline_mode = #tpu.pipeline_mode<synchronous>, transform_indices = @transform_2, window_bounds = array<i64: 1, 128>}, {transform_indices = @transform_3, window_bounds = array<i64: 256, 128>}]} {
    %c0 = arith.constant 0 : index
    %c0_0 = arith.constant 0 : index
    %0 = vector.load %arg1[%c0, %c0_0] : memref<256x64xf32, #tpu.memory_space<vmem>>, vector<256x64xf32>
    %1 = tpu.iota {dimensions = array<i32: 0>} : vector<256x1xi32>
    %c16_i32 = arith.constant 16 : i32
    %c0_i32 = arith.constant 0 : i32
    %2 = arith.cmpi eq, %c16_i32, %c0_i32 : i32
    %c1_i32 = arith.constant 1 : i32
    %3 = arith.select %2, %c1_i32, %c16_i32 : i32
    %4 = vector.broadcast %3 : i32 to vector<256x1xi32>
    %5 = arith.remsi %1, %4 : vector<256x1xi32>
    %c0_i32_1 = arith.constant 0 : i32
    %6 = vector.broadcast %c0_i32_1 : i32 to vector<256x1xi32>
    %7 = arith.cmpi ne, %5, %6 : vector<256x1xi32>
    %c0_i32_2 = arith.constant 0 : i32
    %8 = vector.broadcast %c0_i32_2 : i32 to vector<256x1xi32>
    %9 = arith.cmpi slt, %5, %8 : vector<256x1xi32>
    %c0_i32_3 = arith.constant 0 : i32
    %10 = arith.cmpi slt, %3, %c0_i32_3 : i32
    %11 = vector.broadcast %10 : i1 to vector<256x1xi1>
    %12 = vector.broadcast %11 : vector<256x1xi1> to vector<256x1xi1>
    %13 = arith.xori %9, %12 : vector<256x1xi1>
    %14 = arith.andi %13, %7 : vector<256x1xi1>
    %15 = vector.broadcast %3 : i32 to vector<256x1xi32>
    %16 = arith.addi %5, %15 : vector<256x1xi32>
    %17 = arith.select %14, %16, %5 : vector<256x1xi1>, vector<256x1xi32>
    %c1 = arith.constant 1 : index
    %c0_4 = arith.constant 0 : index
    %c0_5 = arith.constant 0 : index
    %18 = vector.load %arg2[%c1, %c0_4, %c0_5] : memref<3x64x128xf32, #tpu.memory_space<vmem>>, vector<1x64x128xf32>
    %19 = vector.shape_cast %18 : vector<1x64x128xf32> to vector<64x128xf32>
    %cst = arith.constant dense<0.000000e+00> : vector<256x128xf32>
    %20 = tpu.matmul %0, %19, %cst {dimension_numbers = #tpu.dot_dimension_numbers<[1], [0], [0], [1], [0, 0, 1, 1], [], []>} : vector<256x64xf32>, vector<64x128xf32>, vector<256x128xf32> -> vector<256x128xf32>
    %c1_i32_6 = arith.constant 1 : i32
    %21 = tpu.dynamic_rotate %0 by %c1_i32_6 dim 0 : vector<256x64xf32>, i32 -> vector<256x64xf32>
    %c0_i32_7 = arith.constant 0 : i32
    %22 = vector.broadcast %c0_i32_7 : i32 to vector<256x1xi32>
    %23 = arith.cmpi ne, %17, %22 : vector<256x1xi32>
    %24 = arith.extui %23 : vector<256x1xi1> to vector<256x1xi32>
    %25 = arith.sitofp %24 : vector<256x1xi32> to vector<256x1xf32>
    %26 = vector.broadcast %25 : vector<256x1xf32> to vector<256x64xf32>
    %27 = arith.mulf %21, %26 : vector<256x64xf32>
    %c0_8 = arith.constant 0 : index
    %c0_9 = arith.constant 0 : index
    %c0_10 = arith.constant 0 : index
    %28 = vector.load %arg2[%c0_8, %c0_9, %c0_10] : memref<3x64x128xf32, #tpu.memory_space<vmem>>, vector<1x64x128xf32>
    %29 = vector.shape_cast %28 : vector<1x64x128xf32> to vector<64x128xf32>
    %cst_11 = arith.constant dense<0.000000e+00> : vector<256x128xf32>
    %30 = tpu.matmul %27, %29, %cst_11 {dimension_numbers = #tpu.dot_dimension_numbers<[1], [0], [0], [1], [0, 0, 1, 1], [], []>} : vector<256x64xf32>, vector<64x128xf32>, vector<256x128xf32> -> vector<256x128xf32>
    %31 = arith.addf %20, %30 : vector<256x128xf32>
    %c255_i32 = arith.constant 255 : i32
    %32 = tpu.dynamic_rotate %0 by %c255_i32 dim 0 : vector<256x64xf32>, i32 -> vector<256x64xf32>
    %c15_i32 = arith.constant 15 : i32
    %33 = vector.broadcast %c15_i32 : i32 to vector<256x1xi32>
    %34 = arith.cmpi ne, %17, %33 : vector<256x1xi32>
    %35 = arith.extui %34 : vector<256x1xi1> to vector<256x1xi32>
    %36 = arith.sitofp %35 : vector<256x1xi32> to vector<256x1xf32>
    %37 = vector.broadcast %36 : vector<256x1xf32> to vector<256x64xf32>
    %38 = arith.mulf %32, %37 : vector<256x64xf32>
    %c2 = arith.constant 2 : index
    %c0_12 = arith.constant 0 : index
    %c0_13 = arith.constant 0 : index
    %39 = vector.load %arg2[%c2, %c0_12, %c0_13] : memref<3x64x128xf32, #tpu.memory_space<vmem>>, vector<1x64x128xf32>
    %40 = vector.shape_cast %39 : vector<1x64x128xf32> to vector<64x128xf32>
    %cst_14 = arith.constant dense<0.000000e+00> : vector<256x128xf32>
    %41 = tpu.matmul %38, %40, %cst_14 {dimension_numbers = #tpu.dot_dimension_numbers<[1], [0], [0], [1], [0, 0, 1, 1], [], []>} : vector<256x64xf32>, vector<64x128xf32>, vector<256x128xf32> -> vector<256x128xf32>
    %42 = arith.addf %31, %41 : vector<256x128xf32>
    %c0_15 = arith.constant 0 : index
    %c0_16 = arith.constant 0 : index
    %43 = vector.load %arg3[%c0_15, %c0_16] : memref<1x128xf32, #tpu.memory_space<vmem>>, vector<1x128xf32>
    %44 = vector.broadcast %43 : vector<1x128xf32> to vector<256x128xf32>
    %45 = arith.addf %42, %44 : vector<256x128xf32>
    %c0_17 = arith.constant 0 : index
    %c0_18 = arith.constant 0 : index
    %46 = vector.load %arg4[%c0_17, %c0_18] : memref<256x128xf32, #tpu.memory_space<vmem>>, vector<256x128xf32>
    tpu.vector_store %arg4[%c0_17, %c0_18], %45 {strides = array<i32>} : memref<256x128xf32, #tpu.memory_space<vmem>>, vector<256x128xf32>,
    return
  }
  func.func @transform_0(%arg0: i32) -> (i32, i32) {
    %c0_i32 = arith.constant 0 : i32
    %c0_i32_0 = arith.constant 0 : i32
    return %arg0, %c0_i32 : i32, i32
  }
  func.func @transform_1(%arg0: i32) -> (i32, i32, i32) {
    %c0_i32 = arith.constant 0 : i32
    %c0_i32_0 = arith.constant 0 : i32
    %c0_i32_1 = arith.constant 0 : i32
    %c0_i32_2 = arith.constant 0 : i32
    return %c0_i32, %c0_i32_0, %c0_i32_1 : i32, i32, i32
  }
  func.func @transform_2(%arg0: i32) -> (i32, i32) {
    %c0_i32 = arith.constant 0 : i32
    %c0_i32_0 = arith.constant 0 : i32
    %c0_i32_1 = arith.constant 0 : i32
    return %c0_i32, %c0_i32_0 : i32, i32
  }
  func.func @transform_3(%arg0: i32) -> (i32, i32) {
    %c0_i32 = arith.constant 0 : i32
    %c0_i32_0 = arith.constant 0 : i32
    return %arg0, %c0_i32 : i32, i32
  }
}

</mosaic_0001>

<llo_original>
// kernel: tile.8
$region0: #{tile.8}
  #allocation0 [shape = 's32[1]{0}', space=sflag, size = 0x4, scoped, tag = 'scoped memory for tile.8']
  %s0 = inlined_call_operand.vmem [shape: f32[8], index: 0, kind: input, shape index: {}]
  %s1 = inlined_call_operand.vmem [shape: f32[16,8], index: 1, kind: output, shape index: {}]
  // Predicated region
  $region2: #{tile.8} parent=0 // pred_check
    _
  $region3: #{tile.8} parent=0 // pred_check_branch
    %3 = sbr.rel (0) target = $region5
  $region4: #{tile.8} parent=0 // pred_region
    _
  $region5: #{tile.8} parent=0 // pred_fallthru
    _
  %v4 = vld [vmem:[%s0] ss:$0 sm:$0xff]
  %5 = vst [vmem:[%s1] sm:$0xff] %v4
  %s6 = scalar_lea.vmem %s1, 8
  %7 = vst [vmem:[%s6] sm:$0xff] %v4

// kernel: tile.9
$region0: #{tile.9}
  %s0 = inlined_call_operand.vmem [shape: f32[16,8], index: 0, kind: input, shape index: {}]
  %s1 = inlined_call_operand.vmem [shape: f32[1,128], index: 1, kind: output, shape index: {}]
  $region1: #{tile.9} parent=0
    #allocation0 [shape = 'u8[4096]{0}', space=vmem, size = 0x1000, scoped, tag = 'scoped mem for output reshape']
    %v2 = vld [vmem:[%s0] sm:$0x1]
    %vm3 = vcmask 64512
    %4 = vst.msk [vmem:[#allocation0] sm:$0x1] %vm3, %v2
    %s5 = scalar_lea.vmem %s0, 15
    %v6 = vld [vmem:[%s5] sm:$0x1]
    %7 = vrot.lane.b32.xlu0 %v6, 120
    %v8 = vpop.permute.xlu0 %7
    %vm9 = vcmask 1048512
    %10 = vst.msk [vmem:[#allocation0] sm:$0x1] %vm9, %v8
    %s11 = scalar_lea.vmem %s0, 14
    %v12 = vld [vmem:[%s11] sm:$0x1]
    %13 = vrot.lane.b32.xlu0 %v12, 112
    %v14 = vpop.permute.xlu0 %13
    %vm15 = vcmask 982912
    %16 = vst.msk [vmem:[#allocation0] sm:$0x1] %vm15, %v14
    %s17 = scalar_lea.vmem %s0, 13
    %v18 = vld [vmem:[%s17] sm:$0x1]
    %19 = vrot.lane.b32.xlu0 %v18, 104
    %v20 = vpop.permute.xlu0 %19
    %vm21 = vcmask 917312
    %22 = vst.msk [vmem:[#allocation0] sm:$0x1] %vm21, %v20
    %s23 = scalar_lea.vmem %s0, 12
    %v24 = vld [vmem:[%s23] sm:$0x1]
    %25 = vrot.lane.b32.xlu0 %v24, 96
    %v26 = vpop.permute.xlu0 %25
    %vm27 = vcmask 851712
    %28 = vst.msk [vmem:[#allocation0] sm:$0x1] %vm27, %v26
    %s29 = scalar_lea.vmem %s0, 11
    %v30 = vld [vmem:[%s29] sm:$0x1]
    %31 = vrot.lane.b32.xlu0 %v30, 88
    %v32 = vpop.permute.xlu0 %31
    %vm33 = vcmask 786112
    %34 = vst.msk [vmem:[#allocation0] sm:$0x1] %vm33, %v32
    %s35 = scalar_lea.vmem %s0, 10
    %v36 = vld [vmem:[%s35] sm:$0x1]
    %37 = vrot.lane.b32.xlu0 %v36, 80
    %v38 = vpop.permute.xlu0 %37
    %vm39 = vcmask 720512
    %40 = vst.msk [vmem:[#allocation0] sm:$0x1] %vm39, %v38
    %s41 = scalar_lea.vmem %s0, 9
    %v42 = vld [vmem:[%s41] sm:$0x1]
    %43 = vrot.lane.b32.xlu0 %v42, 72
    %v44 = vpop.permute.xlu0 %43
    %vm45 = vcmask 654912
    %46 = vst.msk [vmem:[#allocation0] sm:$0x1] %vm45, %v44
    %s47 = scalar_lea.vmem %s0, 8
    %v48 = vld [vmem:[%s47] sm:$0x1]
    %49 = vrot.lane.b32.xlu0 %v48, 64
    %v50 = vpop.permute.xlu0 %49
    %vm51 = vcmask 589312
    %52 = vst.msk [vmem:[#allocation0] sm:$0x1] %vm51, %v50
    %s53 = scalar_lea.vmem %s0, 7
    %v54 = vld [vmem:[%s53] sm:$0x1]
    %55 = vrot.lane.b32.xlu0 %v54, 56
    %v56 = vpop.permute.xlu0 %55
    %vm57 = vcmask 523712
    %58 = vst.msk [vmem:[#allocation0] sm:$0x1] %vm57, %v56
    %s59 = scalar_lea.vmem %s0, 6
    %v60 = vld [vmem:[%s59] sm:$0x1]
    %61 = vrot.lane.b32.xlu0 %v60, 48
    %v62 = vpop.permute.xlu0 %61
    %vm63 = vcmask 458112
    %64 = vst.msk [vmem:[#allocation0] sm:$0x1] %vm63, %v62
    %s65 = scalar_lea.vmem %s0, 5
    %v66 = vld [vmem:[%s65] sm:$0x1]
    %67 = vrot.lane.b32.xlu0 %v66, 40
    %v68 = vpop.permute.xlu0 %67
    %vm69 = vcmask 392512
    %70 = vst.msk [vmem:[#allocation0] sm:$0x1] %vm69, %v68
    %s71 = scalar_lea.vmem %s0, 4
    %v72 = vld [vmem:[%s71] sm:$0x1]
    %73 = vrot.lane.b32.xlu0 %v72, 32
    %v74 = vpop.permute.xlu0 %73
    %vm75 = vcmask 326912
    %76 = vst.msk [vmem:[#allocation0] sm:$0x1] %vm75, %v74
    %s77 = scalar_lea.vmem %s0, 3
    %v78 = vld [vmem:[%s77] sm:$0x1]
    %79 = vrot.lane.b32.xlu0 %v78, 24
    %v80 = vpop.permute.xlu0 %79
    %vm81 = vcmask 261312
    %82 = vst.msk [vmem:[#allocation0] sm:$0x1] %vm81, %v80
    %s83 = scalar_lea.vmem %s0, 2
    %v84 = vld [vmem:[%s83] sm:$0x1]
    %85 = vrot.lane.b32.xlu0 %v84, 16
    %v86 = vpop.permute.xlu0 %85
    %vm87 = vcmask 195712
    %88 = vst.msk [vmem:[#allocation0] sm:$0x1] %vm87, %v86
    %s89 = scalar_lea.vmem %s0, 1
    %v90 = vld [vmem:[%s89] sm:$0x1]
    %91 = vrot.lane.b32.xlu0 %v90, 8
    %v92 = vpop.permute.xlu0 %91
    %vm93 = vcmask 130112
    %94 = vst.msk [vmem:[#allocation0] sm:$0x1] %vm93, %v92
    %s96 = sshll.u32 1, 1
    %s97 = ssub.s32 %s96, 1
    %v99 = vld [vmem:[#allocation0] sm:%s97]
    %s100 = sshll.u32 1, 1
    %s101 = ssub.s32 %s100, 1
    %102 = vst [vmem:[%s1] sm:%s101] %v99

// kernel: seq_to_ann_container.1
$region0: #{seq_to_ann_container.1}
  #allocation0 [shape = 'u32[]', space=smem, size = 0x4, offset = 0x4, fixed_abs, tag = 'smem constant byte address 0x4 - core index']
  #allocation1 [shape = 'u32[144,128]{1,0:T(1,128)}', space=vmem, size = 0x12000, scoped, tag = 'internal scratch']
  %s0 = inlined_call_operand.vmem [shape: f32[256,64], index: 0, kind: input, shape index: {}]
  %s1 = inlined_call_operand.vmem [shape: f32[3,64,128], index: 1, kind: input, shape index: {}]
  %s2 = inlined_call_operand.vmem [shape: f32[1,128], index: 2, kind: input, shape index: {}]
  %s3 = inlined_call_operand.vmem [shape: f32[256,128], index: 3, kind: output, shape index: {}]
  %s4 = sld [smem:[#allocation0]]
  $region22: #{seq_to_ann_container.1} parent=0
    _
  %s6 = ssub.s32 1, %s4
  %s7 = scalar_select 0, %s6, %s4
  // Predicated region
  $region2: #{seq_to_ann_container.1} parent=0 // pred_check
    _
  $region3: #{seq_to_ann_container.1} parent=0 // pred_check_branch
    %9 = sbr.rel (0) target = $region5
  $region4: #{seq_to_ann_container.1} parent=0 // pred_region
    _
  $region5: #{seq_to_ann_container.1} parent=0 // pred_fallthru
    _
  // Predicated region
  $region6: #{seq_to_ann_container.1} parent=0 // pred_check
    _
  $region7: #{seq_to_ann_container.1} parent=0 // pred_check_branch
    %11 = sbr.rel (0) target = $region9
  $region8: #{seq_to_ann_container.1} parent=0 // pred_region
    _
  $region9: #{seq_to_ann_container.1} parent=0 // pred_fallthru
    _
  // Predicated region
  $region10: #{seq_to_ann_container.1} parent=0 // pred_check
    _
  $region11: #{seq_to_ann_container.1} parent=0 // pred_check_branch
    %13 = sbr.rel (0) target = $region13
  $region12: #{seq_to_ann_container.1} parent=0 // pred_region
    _
  $region13: #{seq_to_ann_container.1} parent=0 // pred_fallthru
    _
  %v14 = vld [vmem:[%s0] sm:$0xff]
  %v15 = vld [vmem:[%s0 + $0x8] sm:$0xff]
  %v16 = vld [vmem:[%s0 + $0x10] sm:$0xff]
  %v17 = vld [vmem:[%s0 + $0x18] sm:$0xff]
  %v18 = vld [vmem:[%s0 + $0x20] sm:$0xff]
  %v19 = vld [vmem:[%s0 + $0x28] sm:$0xff]
  %v20 = vld [vmem:[%s0 + $0x30] sm:$0xff]
  %v21 = vld [vmem:[%s0 + $0x38] sm:$0xff]
  %v22 = vld [vmem:[%s0 + $0x40] sm:$0xff]
  %v23 = vld [vmem:[%s0 + $0x48] sm:$0xff]
  %v24 = vld [vmem:[%s0 + $0x50] sm:$0xff]
  %v25 = vld [vmem:[%s0 + $0x58] sm:$0xff]
  %v26 = vld [vmem:[%s0 + $0x60] sm:$0xff]
  %v27 = vld [vmem:[%s0 + $0x68] sm:$0xff]
  %v28 = vld [vmem:[%s0 + $0x70] sm:$0xff]
  %v29 = vld [vmem:[%s0 + $0x78] sm:$0xff]
  %v30 = vld [vmem:[%s0 + $0x80] sm:$0xff]
  %v31 = vld [vmem:[%s0 + $0x88] sm:$0xff]
  %v32 = vld [vmem:[%s0 + $0x90] sm:$0xff]
  %v33 = vld [vmem:[%s0 + $0x98] sm:$0xff]
  %v34 = vld [vmem:[%s0 + $0xa0] sm:$0xff]
  %v35 = vld [vmem:[%s0 + $0xa8] sm:$0xff]
  %v36 = vld [vmem:[%s0 + $0xb0] sm:$0xff]
  %v37 = vld [vmem:[%s0 + $0xb8] sm:$0xff]
  %v38 = vld [vmem:[%s0 + $0xc0] sm:$0xff]
  %v39 = vld [vmem:[%s0 + $0xc8] sm:$0xff]
  %v40 = vld [vmem:[%s0 + $0xd0] sm:$0xff]
  %v41 = vld [vmem:[%s0 + $0xd8] sm:$0xff]
  %v42 = vld [vmem:[%s0 + $0xe0] sm:$0xff]
  %v43 = vld [vmem:[%s0 + $0xe8] sm:$0xff]
  %v44 = vld [vmem:[%s0 + $0xf0] sm:$0xff]
  %v45 = vld [vmem:[%s0 + $0xf8] sm:$0xff]
  %v46 = vlaneseq
  %v47 = vshrl.u32 %v46, 7
  %v48 = vadd.s32 %v47, 8
  %v49 = vadd.s32 %v47, 16
  %v50 = vadd.s32 %v47, 24
  %v51 = vadd.s32 %v47, 32
  %v52 = vadd.s32 %v47, 40
  %v53 = vadd.s32 %v47, 48
  %v54 = vadd.s32 %v47, 56
  %v55 = vadd.s32 %v47, 64
  %v56 = vadd.s32 %v47, 72
  %v57 = vadd.s32 %v47, 80
  %v58 = vadd.s32 %v47, 88
  %v59 = vadd.s32 %v47, 96
  %v60 = vadd.s32 %v47, 104
  %v61 = vadd.s32 %v47, 112
  %v62 = vadd.s32 %v47, 120
  %v63 = vadd.s32 %v47, 128
  %v64 = vadd.s32 %v47, 136
  %v65 = vadd.s32 %v47, 144
  %v66 = vadd.s32 %v47, 152
  %v67 = vadd.s32 %v47, 160
  %v68 = vadd.s32 %v47, 168
  %v69 = vadd.s32 %v47, 176
  %v70 = vadd.s32 %v47, 184
  %v71 = vadd.s32 %v47, 192
  %v72 = vadd.s32 %v47, 200
  %v73 = vadd.s32 %v47, 208
  %v74 = vadd.s32 %v47, 216
  %v75 = vadd.s32 %v47, 224
  %v76 = vadd.s32 %v47, 232
  %v77 = vadd.s32 %v47, 240
  %v78 = vadd.s32 %v47, 248
  %vm79 = vcmp.lt.s32.totalorder %v47, 0
  %v80 = vsub.s32 0, %v47
  %v81 = vsel %vm79, %v80, %v47
  %v82 = vshrl.u32 %v81, 4
  %v83 = vand.u32 %v81, 15
  %v84 = vsub.s32 0, %v83
  %v85 = vsel %vm79, %v84, %v83
  %vm86 = vcmp.lt.s32.totalorder %v48, 0
  %v87 = vsub.s32 0, %v48
  %v88 = vsel %vm86, %v87, %v48
  %v89 = vshrl.u32 %v88, 4
  %v90 = vand.u32 %v88, 15
  %v91 = vsub.s32 0, %v90
  %v92 = vsel %vm86, %v91, %v90
  %vm93 = vcmp.lt.s32.totalorder %v49, 0
  %v94 = vsub.s32 0, %v49
  %v95 = vsel %vm93, %v94, %v49
  %v96 = vshrl.u32 %v95, 4
  %v97 = vand.u32 %v95, 15
  %v98 = vsub.s32 0, %v97
  %v99 = vsel %vm93, %v98, %v97
  %vm100 = vcmp.lt.s32.totalorder %v50, 0
  %v101 = vsub.s32 0, %v50
  %v102 = vsel %vm100, %v101, %v50
  %v103 = vshrl.u32 %v102, 4
  %v104 = vand.u32 %v102, 15
  %v105 = vsub.s32 0, %v104
  %v106 = vsel %vm100, %v105, %v104
  %vm107 = vcmp.lt.s32.totalorder %v51, 0
  %v108 = vsub.s32 0, %v51
  %v109 = vsel %vm107, %v108, %v51
  %v110 = vshrl.u32 %v109, 4
  %v111 = vand.u32 %v109, 15
  %v112 = vsub.s32 0, %v111
  %v113 = vsel %vm107, %v112, %v111
  %vm114 = vcmp.lt.s32.totalorder %v52, 0
  %v115 = vsub.s32 0, %v52
  %v116 = vsel %vm114, %v115, %v52
  %v117 = vshrl.u32 %v116, 4
  %v118 = vand.u32 %v116, 15
  %v119 = vsub.s32 0, %v118
  %v120 = vsel %vm114, %v119, %v118
  %vm121 = vcmp.lt.s32.totalorder %v53, 0
  %v122 = vsub.s32 0, %v53
  %v123 = vsel %vm121, %v122, %v53
  %v124 = vshrl.u32 %v123, 4
  %v125 = vand.u32 %v123, 15
  %v126 = vsub.s32 0, %v125
  %v127 = vsel %vm121, %v126, %v125
  %vm128 = vcmp.lt.s32.totalorder %v54, 0
  %v129 = vsub.s32 0, %v54
  %v130 = vsel %vm128, %v129, %v54
  %v131 = vshrl.u32 %v130, 4
  %v132 = vand.u32 %v130, 15
  %v133 = vsub.s32 0, %v132
  %v134 = vsel %vm128, %v133, %v132
  %vm135 = vcmp.lt.s32.totalorder %v55, 0
  %v136 = vsub.s32 0, %v55
  %v137 = vsel %vm135, %v136, %v55
  %v138 = vshrl.u32 %v137, 4
  %v139 = vand.u32 %v137, 15
  %v140 = vsub.s32 0, %v139
  %v141 = vsel %vm135, %v140, %v139
  %vm142 = vcmp.lt.s32.totalorder %v56, 0
  %v143 = vsub.s32 0, %v56
  %v144 = vsel %vm142, %v143, %v56
  %v145 = vshrl.u32 %v144, 4
  %v146 = vand.u32 %v144, 15
  %v147 = vsub.s32 0, %v146
  %v148 = vsel %vm142, %v147, %v146
  %vm149 = vcmp.lt.s32.totalorder %v57, 0
  %v150 = vsub.s32 0, %v57
  %v151 = vsel %vm149, %v150, %v57
  %v152 = vshrl.u32 %v151, 4
  %v153 = vand.u32 %v151, 15
  %v154 = vsub.s32 0, %v153
  %v155 = vsel %vm149, %v154, %v153
  %vm156 = vcmp.lt.s32.totalorder %v58, 0
  %v157 = vsub.s32 0, %v58
  %v158 = vsel %vm156, %v157, %v58
  %v159 = vshrl.u32 %v158, 4
  %v160 = vand.u32 %v158, 15
  %v161 = vsub.s32 0, %v160
  %v162 = vsel %vm156, %v161, %v160
  %vm163 = vcmp.lt.s32.totalorder %v59, 0
  %v164 = vsub.s32 0, %v59
  %v165 = vsel %vm163, %v164, %v59
  %v166 = vshrl.u32 %v165, 4
  %v167 = vand.u32 %v165, 15
  %v168 = vsub.s32 0, %v167
  %v169 = vsel %vm163, %v168, %v167
  %vm170 = vcmp.lt.s32.totalorder %v60, 0
  %v171 = vsub.s32 0, %v60
  %v172 = vsel %vm170, %v171, %v60
  %v173 = vshrl.u32 %v172, 4
  %v174 = vand.u32 %v172, 15
  %v175 = vsub.s32 0, %v174
  %v176 = vsel %vm170, %v175, %v174
  %vm177 = vcmp.lt.s32.totalorder %v61, 0
  %v178 = vsub.s32 0, %v61
  %v179 = vsel %vm177, %v178, %v61
  %v180 = vshrl.u32 %v179, 4
  %v181 = vand.u32 %v179, 15
  %v182 = vsub.s32 0, %v181
  %v183 = vsel %vm177, %v182, %v181
  %vm184 = vcmp.lt.s32.totalorder %v62, 0
  %v185 = vsub.s32 0, %v62
  %v186 = vsel %vm184, %v185, %v62
  %v187 = vshrl.u32 %v186, 4
  %v188 = vand.u32 %v186, 15
  %v189 = vsub.s32 0, %v188
  %v190 = vsel %vm184, %v189, %v188
  %vm191 = vcmp.lt.s32.totalorder %v63, 0
  %v192 = vsub.s32 0, %v63
  %v193 = vsel %vm191, %v192, %v63
  %v194 = vshrl.u32 %v193, 4
  %v195 = vand.u32 %v193, 15
  %v196 = vsub.s32 0, %v195
  %v197 = vsel %vm191, %v196, %v195
  %vm198 = vcmp.lt.s32.totalorder %v64, 0
  %v199 = vsub.s32 0, %v64
  %v200 = vsel %vm198, %v199, %v64
  %v201 = vshrl.u32 %v200, 4
  %v202 = vand.u32 %v200, 15
  %v203 = vsub.s32 0, %v202
  %v204 = vsel %vm198, %v203, %v202
  %vm205 = vcmp.lt.s32.totalorder %v65, 0
  %v206 = vsub.s32 0, %v65
  %v207 = vsel %vm205, %v206, %v65
  %v208 = vshrl.u32 %v207, 4
  %v209 = vand.u32 %v207, 15
  %v210 = vsub.s32 0, %v209
  %v211 = vsel %vm205, %v210, %v209
  %vm212 = vcmp.lt.s32.totalorder %v66, 0
  %v213 = vsub.s32 0, %v66
  %v214 = vsel %vm212, %v213, %v66
  %v215 = vshrl.u32 %v214, 4
  %v216 = vand.u32 %v214, 15
  %v217 = vsub.s32 0, %v216
  %v218 = vsel %vm212, %v217, %v216
  %vm219 = vcmp.lt.s32.totalorder %v67, 0
  %v220 = vsub.s32 0, %v67
  %v221 = vsel %vm219, %v220, %v67
  %v222 = vshrl.u32 %v221, 4
  %v223 = vand.u32 %v221, 15
  %v224 = vsub.s32 0, %v223
  %v225 = vsel %vm219, %v224, %v223
  %vm226 = vcmp.lt.s32.totalorder %v68, 0
  %v227 = vsub.s32 0, %v68
  %v228 = vsel %vm226, %v227, %v68
  %v229 = vshrl.u32 %v228, 4
  %v230 = vand.u32 %v228, 15
  %v231 = vsub.s32 0, %v230
  %v232 = vsel %vm226, %v231, %v230
  %vm233 = vcmp.lt.s32.totalorder %v69, 0
  %v234 = vsub.s32 0, %v69
  %v235 = vsel %vm233, %v234, %v69
  %v236 = vshrl.u32 %v235, 4
  %v237 = vand.u32 %v235, 15
  %v238 = vsub.s32 0, %v237
  %v239 = vsel %vm233, %v238, %v237
  %vm240 = vcmp.lt.s32.totalorder %v70, 0
  %v241 = vsub.s32 0, %v70
  %v242 = vsel %vm240, %v241, %v70
  %v243 = vshrl.u32 %v242, 4
  %v244 = vand.u32 %v242, 15
  %v245 = vsub.s32 0, %v244
  %v246 = vsel %vm240, %v245, %v244
  %vm247 = vcmp.lt.s32.totalorder %v71, 0
  %v248 = vsub.s32 0, %v71
  %v249 = vsel %vm247, %v248, %v71
  %v250 = vshrl.u32 %v249, 4
  %v251 = vand.u32 %v249, 15
  %v252 = vsub.s32 0, %v251
  %v253 = vsel %vm247, %v252, %v251
  %vm254 = vcmp.lt.s32.totalorder %v72, 0
  %v255 = vsub.s32 0, %v72
  %v256 = vsel %vm254, %v255, %v72
  %v257 = vshrl.u32 %v256, 4
  %v258 = vand.u32 %v256, 15
  %v259 = vsub.s32 0, %v258
  %v260 = vsel %vm254, %v259, %v258
  %vm261 = vcmp.lt.s32.totalorder %v73, 0
  %v262 = vsub.s32 0, %v73
  %v263 = vsel %vm261, %v262, %v73
  %v264 = vshrl.u32 %v263, 4
  %v265 = vand.u32 %v263, 15
  %v266 = vsub.s32 0, %v265
  %v267 = vsel %vm261, %v266, %v265
  %vm268 = vcmp.lt.s32.totalorder %v74, 0
  %v269 = vsub.s32 0, %v74
  %v270 = vsel %vm268, %v269, %v74
  %v271 = vshrl.u32 %v270, 4
  %v272 = vand.u32 %v270, 15
  %v273 = vsub.s32 0, %v272
  %v274 = vsel %vm268, %v273, %v272
  %vm275 = vcmp.lt.s32.totalorder %v75, 0
  %v276 = vsub.s32 0, %v75
  %v277 = vsel %vm275, %v276, %v75
  %v278 = vshrl.u32 %v277, 4
  %v279 = vand.u32 %v277, 15
  %v280 = vsub.s32 0, %v279
  %v281 = vsel %vm275, %v280, %v279
  %vm282 = vcmp.lt.s32.totalorder %v76, 0
  %v283 = vsub.s32 0, %v76
  %v284 = vsel %vm282, %v283, %v76
  %v285 = vshrl.u32 %v284, 4
  %v286 = vand.u32 %v284, 15
  %v287 = vsub.s32 0, %v286
  %v288 = vsel %vm282, %v287, %v286
  %vm289 = vcmp.lt.s32.totalorder %v77, 0
  %v290 = vsub.s32 0, %v77
  %v291 = vsel %vm289, %v290, %v77
  %v292 = vshrl.u32 %v291, 4
  %v293 = vand.u32 %v291, 15
  %v294 = vsub.s32 0, %v293
  %v295 = vsel %vm289, %v294, %v293
  %vm296 = vcmp.lt.s32.totalorder %v78, 0
  %v297 = vsub.s32 0, %v78
  %v298 = vsel %vm296, %v297, %v78
  %v299 = vshrl.u32 %v298, 4
  %v300 = vand.u32 %v298, 15
  %v301 = vsub.s32 0, %v300
  %v302 = vsel %vm296, %v301, %v300
  %vm303 = vcmp.ne.s32.totalorder %v85, 0
  %vm304 = vcmp.ne.s32.totalorder %v92, 0
  %vm305 = vcmp.ne.s32.totalorder %v99, 0
  %vm306 = vcmp.ne.s32.totalorder %v106, 0
  %vm307 = vcmp.ne.s32.totalorder %v113, 0
  %vm308 = vcmp.ne.s32.totalorder %v120, 0
  %vm309 = vcmp.ne.s32.totalorder %v127, 0
  %vm310 = vcmp.ne.s32.totalorder %v134, 0
  %vm311 = vcmp.ne.s32.totalorder %v141, 0
  %vm312 = vcmp.ne.s32.totalorder %v148, 0
  %vm313 = vcmp.ne.s32.totalorder %v155, 0
  %vm314 = vcmp.ne.s32.totalorder %v162, 0
  %vm315 = vcmp.ne.s32.totalorder %v169, 0
  %vm316 = vcmp.ne.s32.totalorder %v176, 0
  %vm317 = vcmp.ne.s32.totalorder %v183, 0
  %vm318 = vcmp.ne.s32.totalorder %v190, 0
  %vm319 = vcmp.ne.s32.totalorder %v197, 0
  %vm320 = vcmp.ne.s32.totalorder %v204, 0
  %vm321 = vcmp.ne.s32.totalorder %v211, 0
  %vm322 = vcmp.ne.s32.totalorder %v218, 0
  %vm323 = vcmp.ne.s32.totalorder %v225, 0
  %vm324 = vcmp.ne.s32.totalorder %v232, 0
  %vm325 = vcmp.ne.s32.totalorder %v239, 0
  %vm326 = vcmp.ne.s32.totalorder %v246, 0
  %vm327 = vcmp.ne.s32.totalorder %v253, 0
  %vm328 = vcmp.ne.s32.totalorder %v260, 0
  %vm329 = vcmp.ne.s32.totalorder %v267, 0
  %vm330 = vcmp.ne.s32.totalorder %v274, 0
  %vm331 = vcmp.ne.s32.totalorder %v281, 0
  %vm332 = vcmp.ne.s32.totalorder %v288, 0
  %vm333 = vcmp.ne.s32.totalorder %v295, 0
  %vm334 = vcmp.ne.s32.totalorder %v302, 0
  %vm335 = vcmp.lt.s32.totalorder %v85, 0
  %vm336 = vcmp.lt.s32.totalorder %v92, 0
  %vm337 = vcmp.lt.s32.totalorder %v99, 0
  %vm338 = vcmp.lt.s32.totalorder %v106, 0
  %vm339 = vcmp.lt.s32.totalorder %v113, 0
  %vm340 = vcmp.lt.s32.totalorder %v120, 0
  %vm341 = vcmp.lt.s32.totalorder %v127, 0
  %vm342 = vcmp.lt.s32.totalorder %v134, 0
  %vm343 = vcmp.lt.s32.totalorder %v141, 0
  %vm344 = vcmp.lt.s32.totalorder %v148, 0
  %vm345 = vcmp.lt.s32.totalorder %v155, 0
  %vm346 = vcmp.lt.s32.totalorder %v162, 0
  %vm347 = vcmp.lt.s32.totalorder %v169, 0
  %vm348 = vcmp.lt.s32.totalorder %v176, 0
  %vm349 = vcmp.lt.s32.totalorder %v183, 0
  %vm350 = vcmp.lt.s32.totalorder %v190, 0
  %vm351 = vcmp.lt.s32.totalorder %v197, 0
  %vm352 = vcmp.lt.s32.totalorder %v204, 0
  %vm353 = vcmp.lt.s32.totalorder %v211, 0
  %vm354 = vcmp.lt.s32.totalorder %v218, 0
  %vm355 = vcmp.lt.s32.totalorder %v225, 0
  %vm356 = vcmp.lt.s32.totalorder %v232, 0
  %vm357 = vcmp.lt.s32.totalorder %v239, 0
  %vm358 = vcmp.lt.s32.totalorder %v246, 0
  %vm359 = vcmp.lt.s32.totalorder %v253, 0
  %vm360 = vcmp.lt.s32.totalorder %v260, 0
  %vm361 = vcmp.lt.s32.totalorder %v267, 0
  %vm362 = vcmp.lt.s32.totalorder %v274, 0
  %vm363 = vcmp.lt.s32.totalorder %v281, 0
  %vm364 = vcmp.lt.s32.totalorder %v288, 0
  %vm365 = vcmp.lt.s32.totalorder %v295, 0
  %vm366 = vcmp.lt.s32.totalorder %v302, 0
  %vm367 = vmand %vm335, %vm303
  %vm368 = vmand %vm336, %vm304
  %vm369 = vmand %vm337, %vm305
  %vm370 = vmand %vm338, %vm306
  %vm371 = vmand %vm339, %vm307
  %vm372 = vmand %vm340, %vm308
  %vm373 = vmand %vm341, %vm309
  %vm374 = vmand %vm342, %vm310
  %vm375 = vmand %vm343, %vm311
  %vm376 = vmand %vm344, %vm312
  %vm377 = vmand %vm345, %vm313
  %vm378 = vmand %vm346, %vm314
  %vm379 = vmand %vm347, %vm315
  %vm380 = vmand %vm348, %vm316
  %vm381 = vmand %vm349, %vm317
  %vm382 = vmand %vm350, %vm318
  %vm383 = vmand %vm351, %vm319
  %vm384 = vmand %vm352, %vm320
  %vm385 = vmand %vm353, %vm321
  %vm386 = vmand %vm354, %vm322
  %vm387 = vmand %vm355, %vm323
  %vm388 = vmand %vm356, %vm324
  %vm389 = vmand %vm357, %vm325
  %vm390 = vmand %vm358, %vm326
  %vm391 = vmand %vm359, %vm327
  %vm392 = vmand %vm360, %vm328
  %vm393 = vmand %vm361, %vm329
  %vm394 = vmand %vm362, %vm330
  %vm395 = vmand %vm363, %vm331
  %vm396 = vmand %vm364, %vm332
  %vm397 = vmand %vm365, %vm333
  %vm398 = vmand %vm366, %vm334
  %v399 = vadd.s32 %v85, 16
  %v400 = vadd.s32 %v92, 16
  %v401 = vadd.s32 %v99, 16
  %v402 = vadd.s32 %v106, 16
  %v403 = vadd.s32 %v113, 16
  %v404 = vadd.s32 %v120, 16
  %v405 = vadd.s32 %v127, 16
  %v406 = vadd.s32 %v134, 16
  %v407 = vadd.s32 %v141, 16
  %v408 = vadd.s32 %v148, 16
  %v409 = vadd.s32 %v155, 16
  %v410 = vadd.s32 %v162, 16
  %v411 = vadd.s32 %v169, 16
  %v412 = vadd.s32 %v176, 16
  %v413 = vadd.s32 %v183, 16
  %v414 = vadd.s32 %v190, 16
  %v415 = vadd.s32 %v197, 16
  %v416 = vadd.s32 %v204, 16
  %v417 = vadd.s32 %v211, 16
  %v418 = vadd.s32 %v218, 16
  %v419 = vadd.s32 %v225, 16
  %v420 = vadd.s32 %v232, 16
  %v421 = vadd.s32 %v239, 16
  %v422 = vadd.s32 %v246, 16
  %v423 = vadd.s32 %v253, 16
  %v424 = vadd.s32 %v260, 16
  %v425 = vadd.s32 %v267, 16
  %v426 = vadd.s32 %v274, 16
  %v427 = vadd.s32 %v281, 16
  %v428 = vadd.s32 %v288, 16
  %v429 = vadd.s32 %v295, 16
  %v430 = vadd.s32 %v302, 16
  %v431 = vsel %vm367, %v399, %v85
  %v432 = vsel %vm368, %v400, %v92
  %v433 = vsel %vm369, %v401, %v99
  %v434 = vsel %vm370, %v402, %v106
  %v435 = vsel %vm371, %v403, %v113
  %v436 = vsel %vm372, %v404, %v120
  %v437 = vsel %vm373, %v405, %v127
  %v438 = vsel %vm374, %v406, %v134
  %v439 = vsel %vm375, %v407, %v141
  %v440 = vsel %vm376, %v408, %v148
  %v441 = vsel %vm377, %v409, %v155
  %v442 = vsel %vm378, %v410, %v162
  %v443 = vsel %vm379, %v411, %v169
  %v444 = vsel %vm380, %v412, %v176
  %v445 = vsel %vm381, %v413, %v183
  %v446 = vsel %vm382, %v414, %v190
  %v447 = vsel %vm383, %v415, %v197
  %v448 = vsel %vm384, %v416, %v204
  %v449 = vsel %vm385, %v417, %v211
  %v450 = vsel %vm386, %v418, %v218
  %v451 = vsel %vm387, %v419, %v225
  %v452 = vsel %vm388, %v420, %v232
  %v453 = vsel %vm389, %v421, %v239
  %v454 = vsel %vm390, %v422, %v246
  %v455 = vsel %vm391, %v423, %v253
  %v456 = vsel %vm392, %v424, %v260
  %v457 = vsel %vm393, %v425, %v267
  %v458 = vsel %vm394, %v426, %v274
  %v459 = vsel %vm395, %v427, %v281
  %v460 = vsel %vm396, %v428, %v288
  %v461 = vsel %vm397, %v429, %v295
  %v462 = vsel %vm398, %v430, %v302
  %s463 = scalar_lea.vmem %s1, 64
  %v464 = vld [vmem:[%s463] sm:$0xff]
  %v465 = vld [vmem:[%s463 + $0x8] sm:$0xff]
  %v466 = vld [vmem:[%s463 + $0x10] sm:$0xff]
  %v467 = vld [vmem:[%s463 + $0x18] sm:$0xff]
  %v468 = vld [vmem:[%s463 + $0x20] sm:$0xff]
  %v469 = vld [vmem:[%s463 + $0x28] sm:$0xff]
  %v470 = vld [vmem:[%s463 + $0x30] sm:$0xff]
  %v471 = vld [vmem:[%s463 + $0x38] sm:$0xff]
  %v472 = vrot.slane %v14, 7
  %v473 = vrot.slane %v15, 7
  %v474 = vrot.slane %v16, 7
  %v475 = vrot.slane %v17, 7
  %v476 = vrot.slane %v18, 7
  %v477 = vrot.slane %v19, 7
  %v478 = vrot.slane %v20, 7
  %v479 = vrot.slane %v21, 7
  %v480 = vrot.slane %v22, 7
  %v481 = vrot.slane %v23, 7
  %v482 = vrot.slane %v24, 7
  %v483 = vrot.slane %v25, 7
  %v484 = vrot.slane %v26, 7
  %v485 = vrot.slane %v27, 7
  %v486 = vrot.slane %v28, 7
  %v487 = vrot.slane %v29, 7
  %v488 = vrot.slane %v30, 7
  %v489 = vrot.slane %v31, 7
  %v490 = vrot.slane %v32, 7
  %v491 = vrot.slane %v33, 7
  %v492 = vrot.slane %v34, 7
  %v493 = vrot.slane %v35, 7
  %v494 = vrot.slane %v36, 7
  %v495 = vrot.slane %v37, 7
  %v496 = vrot.slane %v38, 7
  %v497 = vrot.slane %v39, 7
  %v498 = vrot.slane %v40, 7
  %v499 = vrot.slane %v41, 7
  %v500 = vrot.slane %v42, 7
  %v501 = vrot.slane %v43, 7
  %v502 = vrot.slane %v44, 7
  %v503 = vrot.slane %v45, 7
  %vm504 = vcmp.lt.s32.totalorder %v47, 1
  %v505 = vsel %vm504, %v502, %v503
  %v506 = vsel %vm504, %v501, %v502
  %v507 = vsel %vm504, %v500, %v501
  %v508 = vsel %vm504, %v499, %v500
  %v509 = vsel %vm504, %v498, %v499
  %v510 = vsel %vm504, %v497, %v498
  %v511 = vsel %vm504, %v496, %v497
  %v512 = vsel %vm504, %v495, %v496
  %v513 = vsel %vm504, %v494, %v495
  %v514 = vsel %vm504, %v493, %v494
  %v515 = vsel %vm504, %v492, %v493
  %v516 = vsel %vm504, %v491, %v492
  %v517 = vsel %vm504, %v490, %v491
  %v518 = vsel %vm504, %v489, %v490
  %v519 = vsel %vm504, %v488, %v489
  %v520 = vsel %vm504, %v487, %v488
  %v521 = vsel %vm504, %v486, %v487
  %v522 = vsel %vm504, %v485, %v486
  %v523 = vsel %vm504, %v484, %v485
  %v524 = vsel %vm504, %v483, %v484
  %v525 = vsel %vm504, %v482, %v483
  %v526 = vsel %vm504, %v481, %v482
  %v527 = vsel %vm504, %v480, %v481
  %v528 = vsel %vm504, %v479, %v480
  %v529 = vsel %vm504, %v478, %v479
  %v530 = vsel %vm504, %v477, %v478
  %v531 = vsel %vm504, %v476, %v477
  %v532 = vsel %vm504, %v475, %v476
  %v533 = vsel %vm504, %v474, %v475
  %v534 = vsel %vm504, %v473, %v474
  %v535 = vsel %vm504, %v472, %v473
  %v536 = vsel %vm504, %v503, %v472
  %vm537 = vcmp.ne.s32.totalorder %v431, 0
  %vm538 = vcmp.ne.s32.totalorder %v432, 0
  %vm539 = vcmp.ne.s32.totalorder %v433, 0
  %vm540 = vcmp.ne.s32.totalorder %v434, 0
  %vm541 = vcmp.ne.s32.totalorder %v435, 0
  %vm542 = vcmp.ne.s32.totalorder %v436, 0
  %vm543 = vcmp.ne.s32.totalorder %v437, 0
  %vm544 = vcmp.ne.s32.totalorder %v438, 0
  %vm545 = vcmp.ne.s32.totalorder %v439, 0
  %vm546 = vcmp.ne.s32.totalorder %v440, 0
  %vm547 = vcmp.ne.s32.totalorder %v441, 0
  %vm548 = vcmp.ne.s32.totalorder %v442, 0
  %vm549 = vcmp.ne.s32.totalorder %v443, 0
  %vm550 = vcmp.ne.s32.totalorder %v444, 0
  %vm551 = vcmp.ne.s32.totalorder %v445, 0
  %vm552 = vcmp.ne.s32.totalorder %v446, 0
  %vm553 = vcmp.ne.s32.totalorder %v447, 0
  %vm554 = vcmp.ne.s32.totalorder %v448, 0
  %vm555 = vcmp.ne.s32.totalorder %v449, 0
  %vm556 = vcmp.ne.s32.totalorder %v450, 0
  %vm557 = vcmp.ne.s32.totalorder %v451, 0
  %vm558 = vcmp.ne.s32.totalorder %v452, 0
  %vm559 = vcmp.ne.s32.totalorder %v453, 0
  %vm560 = vcmp.ne.s32.totalorder %v454, 0
  %vm561 = vcmp.ne.s32.totalorder %v455, 0
  %vm562 = vcmp.ne.s32.totalorder %v456, 0
  %vm563 = vcmp.ne.s32.totalorder %v457, 0
  %vm564 = vcmp.ne.s32.totalorder %v458, 0
  %vm565 = vcmp.ne.s32.totalorder %v459, 0
  %vm566 = vcmp.ne.s32.totalorder %v460, 0
  %vm567 = vcmp.ne.s32.totalorder %v461, 0
  %vm568 = vcmp.ne.s32.totalorder %v462, 0
  %v569 = vsel %vm537, 1, 0
  %v570 = vsel %vm538, 1, 0
  %v571 = vsel %vm539, 1, 0
  %v572 = vsel %vm540, 1, 0
  %v573 = vsel %vm541, 1, 0
  %v574 = vsel %vm542, 1, 0
  %v575 = vsel %vm543, 1, 0
  %v576 = vsel %vm544, 1, 0
  %v577 = vsel %vm545, 1, 0
  %v578 = vsel %vm546, 1, 0
  %v579 = vsel %vm547, 1, 0
  %v580 = vsel %vm548, 1, 0
  %v581 = vsel %vm549, 1, 0
  %v582 = vsel %vm550, 1, 0
  %v583 = vsel %vm551, 1, 0
  %v584 = vsel %vm552, 1, 0
  %v585 = vsel %vm553, 1, 0
  %v586 = vsel %vm554, 1, 0
  %v587 = vsel %vm555, 1, 0
  %v588 = vsel %vm556, 1, 0
  %v589 = vsel %vm557, 1, 0
  %v590 = vsel %vm558, 1, 0
  %v591 = vsel %vm559, 1, 0
  %v592 = vsel %vm560, 1, 0
  %v593 = vsel %vm561, 1, 0
  %v594 = vsel %vm562, 1, 0
  %v595 = vsel %vm563, 1, 0
  %v596 = vsel %vm564, 1, 0
  %v597 = vsel %vm565, 1, 0
  %v598 = vsel %vm566, 1, 0
  %v599 = vsel %vm567, 1, 0
  %v600 = vsel %vm568, 1, 0
  %v601 = vcvt.s32.f32 %v569
  %v602 = vcvt.s32.f32 %v570
  %v603 = vcvt.s32.f32 %v571
  %v604 = vcvt.s32.f32 %v572
  %v605 = vcvt.s32.f32 %v573
  %v606 = vcvt.s32.f32 %v574
  %v607 = vcvt.s32.f32 %v575
  %v608 = vcvt.s32.f32 %v576
  %v609 = vcvt.s32.f32 %v577
  %v610 = vcvt.s32.f32 %v578
  %v611 = vcvt.s32.f32 %v579
  %v612 = vcvt.s32.f32 %v580
  %v613 = vcvt.s32.f32 %v581
  %v614 = vcvt.s32.f32 %v582
  %v615 = vcvt.s32.f32 %v583
  %v616 = vcvt.s32.f32 %v584
  %v617 = vcvt.s32.f32 %v585
  %v618 = vcvt.s32.f32 %v586
  %v619 = vcvt.s32.f32 %v587
  %v620 = vcvt.s32.f32 %v588
  %v621 = vcvt.s32.f32 %v589
  %v622 = vcvt.s32.f32 %v590
  %v623 = vcvt.s32.f32 %v591
  %v624 = vcvt.s32.f32 %v592
  %v625 = vcvt.s32.f32 %v593
  %v626 = vcvt.s32.f32 %v594
  %v627 = vcvt.s32.f32 %v595
  %v628 = vcvt.s32.f32 %v596
  %v629 = vcvt.s32.f32 %v597
  %v630 = vcvt.s32.f32 %v598
  %v631 = vcvt.s32.f32 %v599
  %v632 = vcvt.s32.f32 %v600
  %v633 = vmul.f32 %v536, %v601
  %v634 = vmul.f32 %v535, %v602
  %v635 = vmul.f32 %v534, %v603
  %v636 = vmul.f32 %v533, %v604
  %v637 = vmul.f32 %v532, %v605
  %v638 = vmul.f32 %v531, %v606
  %v639 = vmul.f32 %v530, %v607
  %v640 = vmul.f32 %v529, %v608
  %v641 = vmul.f32 %v528, %v609
  %v642 = vmul.f32 %v527, %v610
  %v643 = vmul.f32 %v526, %v611
  %v644 = vmul.f32 %v525, %v612
  %v645 = vmul.f32 %v524, %v613
  %v646 = vmul.f32 %v523, %v614
  %v647 = vmul.f32 %v522, %v615
  %v648 = vmul.f32 %v521, %v616
  %v649 = vmul.f32 %v520, %v617
  %v650 = vmul.f32 %v519, %v618
  %v651 = vmul.f32 %v518, %v619
  %v652 = vmul.f32 %v517, %v620
  %v653 = vmul.f32 %v516, %v621
  %v654 = vmul.f32 %v515, %v622
  %v655 = vmul.f32 %v514, %v623
  %v656 = vmul.f32 %v513, %v624
  %v657 = vmul.f32 %v512, %v625
  %v658 = vmul.f32 %v511, %v626
  %v659 = vmul.f32 %v510, %v627
  %v660 = vmul.f32 %v509, %v628
  %v661 = vmul.f32 %v508, %v629
  %v662 = vmul.f32 %v507, %v630
  %v663 = vmul.f32 %v506, %v631
  %v664 = vmul.f32 %v505, %v632
  %v665 = vld [vmem:[%s1] sm:$0xff]
  %v666 = vld [vmem:[%s1 + $0x8] sm:$0xff]
  %v667 = vld [vmem:[%s1 + $0x10] sm:$0xff]
  %v668 = vld [vmem:[%s1 + $0x18] sm:$0xff]
  %v669 = vld [vmem:[%s1 + $0x20] sm:$0xff]
  %v670 = vld [vmem:[%s1 + $0x28] sm:$0xff]
  %v671 = vld [vmem:[%s1 + $0x30] sm:$0xff]
  %v672 = vld [vmem:[%s1 + $0x38] sm:$0xff]
  %vm673 = vcmask 523264
  %v675 = vsel %vm673, %v633, 0
  %v678 = vsel %vm673, %v634, 0
  %v681 = vsel %vm673, %v635, 0
  %v684 = vsel %vm673, %v636, 0
  %v687 = vsel %vm673, %v637, 0
  %v690 = vsel %vm673, %v638, 0
  %v693 = vsel %vm673, %v639, 0
  %v696 = vsel %vm673, %v640, 0
  %v699 = vsel %vm673, %v641, 0
  %v702 = vsel %vm673, %v642, 0
  %v705 = vsel %vm673, %v643, 0
  %v708 = vsel %vm673, %v644, 0
  %v711 = vsel %vm673, %v645, 0
  %v714 = vsel %vm673, %v646, 0
  %v717 = vsel %vm673, %v647, 0
  %v720 = vsel %vm673, %v648, 0
  %v723 = vsel %vm673, %v649, 0
  %v726 = vsel %vm673, %v650, 0
  %v729 = vsel %vm673, %v651, 0
  %v732 = vsel %vm673, %v652, 0
  %v735 = vsel %vm673, %v653, 0
  %v738 = vsel %vm673, %v654, 0
  %v741 = vsel %vm673, %v655, 0
  %v744 = vsel %vm673, %v656, 0
  %v747 = vsel %vm673, %v657, 0
  %v750 = vsel %vm673, %v658, 0
  %v753 = vsel %vm673, %v659, 0
  %v756 = vsel %vm673, %v660, 0
  %v759 = vsel %vm673, %v661, 0
  %v762 = vsel %vm673, %v662, 0
  %v765 = vsel %vm673, %v663, 0
  %v768 = vsel %vm673, %v664, 0
  %770 = vmatprep.subr.mxu0 0.0
  %771 = vmatpush1.msra.mxu0 0.0
  %772 = vmatprep.subr.mxu0 0.0
  %773 = vmatpush1.msra.mxu0 0.0
  %774 = vmatprep.subr.mxu0 0.0
  %775 = vmatpush1.msra.mxu0 0.0
  %776 = vmatprep.subr.mxu0 0.0
  %777 = vmatpush1.msra.mxu0 0.0
  %778 = vmatprep.subr.mxu0 0.0
  %779 = vmatpush1.msra.mxu0 0.0
  %780 = vmatprep.subr.mxu0 0.0
  %781 = vmatpush1.msra.mxu0 0.0
  %782 = vmatprep.subr.mxu0 0.0
  %783 = vmatpush1.msra.mxu0 0.0
  %784 = vmatprep.subr.mxu0 0.0
  %785 = vmatpush1.msra.mxu0 0.0
  %786 = vmatprep.subr.mxu0 0.0
  %787 = vmatpush1.msra.mxu0 %v672
  %788 = vmatprep.subr.mxu0 0.0
  %789 = vmatpush1.msra.mxu0 %v671
  %790 = vmatprep.subr.mxu0 0.0
  %791 = vmatpush1.msra.mxu0 %v670
  %792 = vmatprep.subr.mxu0 0.0
  %793 = vmatpush1.msra.mxu0 %v669
  %794 = vmatprep.subr.mxu0 0.0
  %795 = vmatpush1.msra.mxu0 %v668
  %796 = vmatprep.subr.mxu0 0.0
  %797 = vmatpush1.msra.mxu0 %v667
  %798 = vmatprep.subr.mxu0 0.0
  %799 = vmatpush1.msra.mxu0 %v666
  %800 = vmatprep.subr.mxu0 0.0
  %801 = vmatpush1.msra.mxu0 %v665
  %802 = vmatprep.subr.mxu0 0.0
  %803 = vmatpush2.msra.mxu0 0.0
  %804 = vmatprep.subr.mxu0 0.0
  %805 = vmatpush2.msra.mxu0 0.0
  %806 = vmatprep.subr.mxu0 0.0
  %807 = vmatpush2.msra.mxu0 0.0
  %808 = vmatprep.subr.mxu0 0.0
  %809 = vmatpush2.msra.mxu0 0.0
  %810 = vmatprep.subr.mxu0 0.0
  %811 = vmatpush2.msra.mxu0 0.0
  %812 = vmatprep.subr.mxu0 0.0
  %813 = vmatpush2.msra.mxu0 0.0
  %814 = vmatprep.subr.mxu0 0.0
  %815 = vmatpush2.msra.mxu0 0.0
  %816 = vmatprep.subr.mxu0 0.0
  %817 = vmatpush2.msra.mxu0 0.0
  %818 = vmatprep.subr.mxu0 0.0
  %819 = vmatpush2.msra.mxu0 0.0
  %820 = vmatprep.subr.mxu0 0.0
  %821 = vmatpush2.msra.mxu0 0.0
  %822 = vmatprep.subr.mxu0 0.0
  %823 = vmatpush2.msra.mxu0 0.0
  %824 = vmatprep.subr.mxu0 0.0
  %825 = vmatpush2.msra.mxu0 0.0
  %826 = vmatprep.subr.mxu0 0.0
  %827 = vmatpush2.msra.mxu0 0.0
  %828 = vmatprep.subr.mxu0 0.0
  %829 = vmatpush2.msra.mxu0 0.0
  %830 = vmatprep.subr.mxu0 0.0
  %831 = vmatpush2.msra.mxu0 0.0
  %832 = vmatprep.subr.mxu0 0.0
  %833 = vmatpush2.msra.mxu0 0.0
  %834 = vmatprep.mubr.f32.mxu0 0.0
  %835 = vmatmul.mubr.f32.gmra.mxu0 %v675
  %v836 = vpop.f32.mrf.mxu0
  %v837 = vadd.f32 0.0, %v836
  %v838 = vpop.f32.mrf.mxu0
  %839 = vmatprep.mubr.f32.mxu0 0.0
  %840 = vmatmul.mubr.f32.gmra.mxu0 %v678
  %v841 = vpop.f32.mrf.mxu0
  %v842 = vadd.f32 0.0, %v841
  %v843 = vpop.f32.mrf.mxu0
  %844 = vmatprep.mubr.f32.mxu0 0.0
  %845 = vmatmul.mubr.f32.gmra.mxu0 %v681
  %v846 = vpop.f32.mrf.mxu0
  %v847 = vadd.f32 0.0, %v846
  %v848 = vpop.f32.mrf.mxu0
  %849 = vmatprep.mubr.f32.mxu0 0.0
  %850 = vmatmul.mubr.f32.gmra.mxu0 %v684
  %v851 = vpop.f32.mrf.mxu0
  %v852 = vadd.f32 0.0, %v851
  %v853 = vpop.f32.mrf.mxu0
  %854 = vmatprep.mubr.f32.mxu0 0.0
  %855 = vmatmul.mubr.f32.gmra.mxu0 %v687
  %v856 = vpop.f32.mrf.mxu0
  %v857 = vadd.f32 0.0, %v856
  %v858 = vpop.f32.mrf.mxu0
  %859 = vmatprep.mubr.f32.mxu0 0.0
  %860 = vmatmul.mubr.f32.gmra.mxu0 %v690
  %v861 = vpop.f32.mrf.mxu0
  %v862 = vadd.f32 0.0, %v861
  %v863 = vpop.f32.mrf.mxu0
  %864 = vmatprep.mubr.f32.mxu0 0.0
  %865 = vmatmul.mubr.f32.gmra.mxu0 %v693
  %v866 = vpop.f32.mrf.mxu0
  %v867 = vadd.f32 0.0, %v866
  %v868 = vpop.f32.mrf.mxu0
  %869 = vmatprep.mubr.f32.mxu0 0.0
  %870 = vmatmul.mubr.f32.gmra.mxu0 %v696
  %v871 = vpop.f32.mrf.mxu0
  %v872 = vadd.f32 0.0, %v871
  %v873 = vpop.f32.mrf.mxu0
  %874 = vmatprep.mubr.f32.mxu0 0.0
  %875 = vmatmul.mubr.f32.gmra.mxu0 %v699
  %v876 = vpop.f32.mrf.mxu0
  %v877 = vadd.f32 0.0, %v876
  %v878 = vpop.f32.mrf.mxu0
  %879 = vmatprep.mubr.f32.mxu0 0.0
  %880 = vmatmul.mubr.f32.gmra.mxu0 %v702
  %v881 = vpop.f32.mrf.mxu0
  %v882 = vadd.f32 0.0, %v881
  %v883 = vpop.f32.mrf.mxu0
  %884 = vmatprep.mubr.f32.mxu0 0.0
  %885 = vmatmul.mubr.f32.gmra.mxu0 %v705
  %v886 = vpop.f32.mrf.mxu0
  %v887 = vadd.f32 0.0, %v886
  %v888 = vpop.f32.mrf.mxu0
  %889 = vmatprep.mubr.f32.mxu0 0.0
  %890 = vmatmul.mubr.f32.gmra.mxu0 %v708
  %v891 = vpop.f32.mrf.mxu0
  %v892 = vadd.f32 0.0, %v891
  %v893 = vpop.f32.mrf.mxu0
  %894 = vmatprep.mubr.f32.mxu0 0.0
  %895 = vmatmul.mubr.f32.gmra.mxu0 %v711
  %v896 = vpop.f32.mrf.mxu0
  %v897 = vadd.f32 0.0, %v896
  %v898 = vpop.f32.mrf.mxu0
  %899 = vmatprep.mubr.f32.mxu0 0.0
  %900 = vmatmul.mubr.f32.gmra.mxu0 %v714
  %v901 = vpop.f32.mrf.mxu0
  %v902 = vadd.f32 0.0, %v901
  %v903 = vpop.f32.mrf.mxu0
  %904 = vmatprep.mubr.f32.mxu0 0.0
  %905 = vmatmul.mubr.f32.gmra.mxu0 %v717
  %v906 = vpop.f32.mrf.mxu0
  %v907 = vadd.f32 0.0, %v906
  %v908 = vpop.f32.mrf.mxu0
  %909 = vmatprep.mubr.f32.mxu0 0.0
  %910 = vmatmul.mubr.f32.gmra.mxu0 %v720
  %v911 = vpop.f32.mrf.mxu0
  %v912 = vadd.f32 0.0, %v911
  %v913 = vpop.f32.mrf.mxu0
  %914 = vmatprep.mubr.f32.mxu0 0.0
  %915 = vmatmul.mubr.f32.gmra.mxu0 %v723
  %v916 = vpop.f32.mrf.mxu0
  %v917 = vadd.f32 0.0, %v916
  %v918 = vpop.f32.mrf.mxu0
  %919 = vmatprep.mubr.f32.mxu0 0.0
  %920 = vmatmul.mubr.f32.gmra.mxu0 %v726
  %v921 = vpop.f32.mrf.mxu0
  %v922 = vadd.f32 0.0, %v921
  %v923 = vpop.f32.mrf.mxu0
  %924 = vmatprep.mubr.f32.mxu0 0.0
  %925 = vmatmul.mubr.f32.gmra.mxu0 %v729
  %v926 = vpop.f32.mrf.mxu0
  %v927 = vadd.f32 0.0, %v926
  %v928 = vpop.f32.mrf.mxu0
  %929 = vmatprep.mubr.f32.mxu0 0.0
  %930 = vmatmul.mubr.f32.gmra.mxu0 %v732
  %v931 = vpop.f32.mrf.mxu0
  %v932 = vadd.f32 0.0, %v931
  %v933 = vpop.f32.mrf.mxu0
  %934 = vmatprep.mubr.f32.mxu0 0.0
  %935 = vmatmul.mubr.f32.gmra.mxu0 %v735
  %v936 = vpop.f32.mrf.mxu0
  %v937 = vadd.f32 0.0, %v936
  %v938 = vpop.f32.mrf.mxu0
  %939 = vmatprep.mubr.f32.mxu0 0.0
  %940 = vmatmul.mubr.f32.gmra.mxu0 %v738
  %v941 = vpop.f32.mrf.mxu0
  %v942 = vadd.f32 0.0, %v941
  %v943 = vpop.f32.mrf.mxu0
  %944 = vmatprep.mubr.f32.mxu0 0.0
  %945 = vmatmul.mubr.f32.gmra.mxu0 %v741
  %v946 = vpop.f32.mrf.mxu0
  %v947 = vadd.f32 0.0, %v946
  %v948 = vpop.f32.mrf.mxu0
  %949 = vmatprep.mubr.f32.mxu0 0.0
  %950 = vmatmul.mubr.f32.gmra.mxu0 %v744
  %v951 = vpop.f32.mrf.mxu0
  %v952 = vadd.f32 0.0, %v951
  %v953 = vpop.f32.mrf.mxu0
  %954 = vmatprep.mubr.f32.mxu0 0.0
  %955 = vmatmul.mubr.f32.gmra.mxu0 %v747
  %v956 = vpop.f32.mrf.mxu0
  %v957 = vadd.f32 0.0, %v956
  %v958 = vpop.f32.mrf.mxu0
  %959 = vmatprep.mubr.f32.mxu0 0.0
  %960 = vmatmul.mubr.f32.gmra.mxu0 %v750
  %v961 = vpop.f32.mrf.mxu0
  %v962 = vadd.f32 0.0, %v961
  %v963 = vpop.f32.mrf.mxu0
  %964 = vmatprep.mubr.f32.mxu0 0.0
  %965 = vmatmul.mubr.f32.gmra.mxu0 %v753
  %v966 = vpop.f32.mrf.mxu0
  %v967 = vadd.f32 0.0, %v966
  %v968 = vpop.f32.mrf.mxu0
  %969 = vmatprep.mubr.f32.mxu0 0.0
  %970 = vmatmul.mubr.f32.gmra.mxu0 %v756
  %v971 = vpop.f32.mrf.mxu0
  %v972 = vadd.f32 0.0, %v971
  %v973 = vpop.f32.mrf.mxu0
  %974 = vmatprep.mubr.f32.mxu0 0.0
  %975 = vmatmul.mubr.f32.gmra.mxu0 %v759
  %v976 = vpop.f32.mrf.mxu0
  %v977 = vadd.f32 0.0, %v976
  %v978 = vpop.f32.mrf.mxu0
  %979 = vmatprep.mubr.f32.mxu0 0.0
  %980 = vmatmul.mubr.f32.gmra.mxu0 %v762
  %v981 = vpop.f32.mrf.mxu0
  %v982 = vadd.f32 0.0, %v981
  %v983 = vpop.f32.mrf.mxu0
  %984 = vmatprep.mubr.f32.mxu0 0.0
  %985 = vmatmul.mubr.f32.gmra.mxu0 %v765
  %v986 = vpop.f32.mrf.mxu0
  %v987 = vadd.f32 0.0, %v986
  %v988 = vpop.f32.mrf.mxu0
  %989 = vmatprep.mubr.f32.mxu0 0.0
  %990 = vmatmul.mubr.f32.gmra.mxu0 %v768
  %v991 = vpop.f32.mrf.mxu0
  %v992 = vadd.f32 0.0, %v991
  %v993 = vpop.f32.mrf.mxu0
  %994 = vdwg.mxu0
  %v996 = vsel %vm673, %v14, 0
  %v999 = vsel %vm673, %v15, 0
  %v1002 = vsel %vm673, %v16, 0
  %v1005 = vsel %vm673, %v17, 0
  %v1008 = vsel %vm673, %v18, 0
  %v1011 = vsel %vm673, %v19, 0
  %v1014 = vsel %vm673, %v20, 0
  %v1017 = vsel %vm673, %v21, 0
  %v1020 = vsel %vm673, %v22, 0
  %v1023 = vsel %vm673, %v23, 0
  %v1026 = vsel %vm673, %v24, 0
  %v1029 = vsel %vm673, %v25, 0
  %v1032 = vsel %vm673, %v26, 0
  %v1035 = vsel %vm673, %v27, 0
  %v1038 = vsel %vm673, %v28, 0
  %v1041 = vsel %vm673, %v29, 0
  %v1044 = vsel %vm673, %v30, 0
  %v1047 = vsel %vm673, %v31, 0
  %v1050 = vsel %vm673, %v32, 0
  %v1053 = vsel %vm673, %v33, 0
  %v1056 = vsel %vm673, %v34, 0
  %v1059 = vsel %vm673, %v35, 0
  %v1062 = vsel %vm673, %v36, 0
  %v1065 = vsel %vm673, %v37, 0
  %v1068 = vsel %vm673, %v38, 0
  %v1071 = vsel %vm673, %v39, 0
  %v1074 = vsel %vm673, %v40, 0
  %v1077 = vsel %vm673, %v41, 0
  %v1080 = vsel %vm673, %v42, 0
  %v1083 = vsel %vm673, %v43, 0
  %v1086 = vsel %vm673, %v44, 0
  %v1089 = vsel %vm673, %v45, 0
  %1091 = vmatprep.subr.mxu0 0.0
  %1092 = vmatpush1.msra.mxu0 0.0
  %1093 = vmatprep.subr.mxu0 0.0
  %1094 = vmatpush1.msra.mxu0 0.0
  %1095 = vmatprep.subr.mxu0 0.0
  %1096 = vmatpush1.msra.mxu0 0.0
  %1097 = vmatprep.subr.mxu0 0.0
  %1098 = vmatpush1.msra.mxu0 0.0
  %1099 = vmatprep.subr.mxu0 0.0
  %1100 = vmatpush1.msra.mxu0 0.0
  %1101 = vmatprep.subr.mxu0 0.0
  %1102 = vmatpush1.msra.mxu0 0.0
  %1103 = vmatprep.subr.mxu0 0.0
  %1104 = vmatpush1.msra.mxu0 0.0
  %1105 = vmatprep.subr.mxu0 0.0
  %1106 = vmatpush1.msra.mxu0 0.0
  %1107 = vmatprep.subr.mxu0 0.0
  %1108 = vmatpush1.msra.mxu0 %v471
  %1109 = vmatprep.subr.mxu0 0.0
  %1110 = vmatpush1.msra.mxu0 %v470
  %1111 = vmatprep.subr.mxu0 0.0
  %1112 = vmatpush1.msra.mxu0 %v469
  %1113 = vmatprep.subr.mxu0 0.0
  %1114 = vmatpush1.msra.mxu0 %v468
  %1115 = vmatprep.subr.mxu0 0.0
  %1116 = vmatpush1.msra.mxu0 %v467
  %1117 = vmatprep.subr.mxu0 0.0
  %1118 = vmatpush1.msra.mxu0 %v466
  %1119 = vmatprep.subr.mxu0 0.0
  %1120 = vmatpush1.msra.mxu0 %v465
  %1121 = vmatprep.subr.mxu0 0.0
  %1122 = vmatpush1.msra.mxu0 %v464
  %1123 = vmatprep.subr.mxu0 0.0
  %1124 = vmatpush2.msra.mxu0 0.0
  %1125 = vmatprep.subr.mxu0 0.0
  %1126 = vmatpush2.msra.mxu0 0.0
  %1127 = vmatprep.subr.mxu0 0.0
  %1128 = vmatpush2.msra.mxu0 0.0
  %1129 = vmatprep.subr.mxu0 0.0
  %1130 = vmatpush2.msra.mxu0 0.0
  %1131 = vmatprep.subr.mxu0 0.0
  %1132 = vmatpush2.msra.mxu0 0.0
  %1133 = vmatprep.subr.mxu0 0.0
  %1134 = vmatpush2.msra.mxu0 0.0
  %1135 = vmatprep.subr.mxu0 0.0
  %1136 = vmatpush2.msra.mxu0 0.0
  %1137 = vmatprep.subr.mxu0 0.0
  %1138 = vmatpush2.msra.mxu0 0.0
  %1139 = vmatprep.subr.mxu0 0.0
  %1140 = vmatpush2.msra.mxu0 0.0
  %1141 = vmatprep.subr.mxu0 0.0
  %1142 = vmatpush2.msra.mxu0 0.0
  %1143 = vmatprep.subr.mxu0 0.0
  %1144 = vmatpush2.msra.mxu0 0.0
  %1145 = vmatprep.subr.mxu0 0.0
  %1146 = vmatpush2.msra.mxu0 0.0
  %1147 = vmatprep.subr.mxu0 0.0
  %1148 = vmatpush2.msra.mxu0 0.0
  %1149 = vmatprep.subr.mxu0 0.0
  %1150 = vmatpush2.msra.mxu0 0.0
  %1151 = vmatprep.subr.mxu0 0.0
  %1152 = vmatpush2.msra.mxu0 0.0
  %1153 = vmatprep.subr.mxu0 0.0
  %1154 = vmatpush2.msra.mxu0 0.0
  %1155 = vmatprep.mubr.f32.mxu0 0.0
  %1156 = vmatmul.mubr.f32.gmra.mxu0 %v996
  %v1157 = vpop.f32.mrf.mxu0
  %v1158 = vadd.f32 %v837, %v1157
  %v1159 = vpop.f32.mrf.mxu0
  %1160 = vmatprep.mubr.f32.mxu0 0.0
  %1161 = vmatmul.mubr.f32.gmra.mxu0 %v999
  %v1162 = vpop.f32.mrf.mxu0
  %v1163 = vadd.f32 %v842, %v1162
  %v1164 = vpop.f32.mrf.mxu0
  %1165 = vmatprep.mubr.f32.mxu0 0.0
  %1166 = vmatmul.mubr.f32.gmra.mxu0 %v1002
  %v1167 = vpop.f32.mrf.mxu0
  %v1168 = vadd.f32 %v847, %v1167
  %v1169 = vpop.f32.mrf.mxu0
  %1170 = vmatprep.mubr.f32.mxu0 0.0
  %1171 = vmatmul.mubr.f32.gmra.mxu0 %v1005
  %v1172 = vpop.f32.mrf.mxu0
  %v1173 = vadd.f32 %v852, %v1172
  %v1174 = vpop.f32.mrf.mxu0
  %1175 = vmatprep.mubr.f32.mxu0 0.0
  %1176 = vmatmul.mubr.f32.gmra.mxu0 %v1008
  %v1177 = vpop.f32.mrf.mxu0
  %v1178 = vadd.f32 %v857, %v1177
  %v1179 = vpop.f32.mrf.mxu0
  %1180 = vmatprep.mubr.f32.mxu0 0.0
  %1181 = vmatmul.mubr.f32.gmra.mxu0 %v1011
  %v1182 = vpop.f32.mrf.mxu0
  %v1183 = vadd.f32 %v862, %v1182
  %v1184 = vpop.f32.mrf.mxu0
  %1185 = vmatprep.mubr.f32.mxu0 0.0
  %1186 = vmatmul.mubr.f32.gmra.mxu0 %v1014
  %v1187 = vpop.f32.mrf.mxu0
  %v1188 = vadd.f32 %v867, %v1187
  %v1189 = vpop.f32.mrf.mxu0
  %1190 = vmatprep.mubr.f32.mxu0 0.0
  %1191 = vmatmul.mubr.f32.gmra.mxu0 %v1017
  %v1192 = vpop.f32.mrf.mxu0
  %v1193 = vadd.f32 %v872, %v1192
  %v1194 = vpop.f32.mrf.mxu0
  %1195 = vmatprep.mubr.f32.mxu0 0.0
  %1196 = vmatmul.mubr.f32.gmra.mxu0 %v1020
  %v1197 = vpop.f32.mrf.mxu0
  %v1198 = vadd.f32 %v877, %v1197
  %v1199 = vpop.f32.mrf.mxu0
  %1200 = vmatprep.mubr.f32.mxu0 0.0
  %1201 = vmatmul.mubr.f32.gmra.mxu0 %v1023
  %v1202 = vpop.f32.mrf.mxu0
  %v1203 = vadd.f32 %v882, %v1202
  %v1204 = vpop.f32.mrf.mxu0
  %1205 = vmatprep.mubr.f32.mxu0 0.0
  %1206 = vmatmul.mubr.f32.gmra.mxu0 %v1026
  %v1207 = vpop.f32.mrf.mxu0
  %v1208 = vadd.f32 %v887, %v1207
  %v1209 = vpop.f32.mrf.mxu0
  %1210 = vmatprep.mubr.f32.mxu0 0.0
  %1211 = vmatmul.mubr.f32.gmra.mxu0 %v1029
  %v1212 = vpop.f32.mrf.mxu0
  %v1213 = vadd.f32 %v892, %v1212
  %v1214 = vpop.f32.mrf.mxu0
  %1215 = vmatprep.mubr.f32.mxu0 0.0
  %1216 = vmatmul.mubr.f32.gmra.mxu0 %v1032
  %v1217 = vpop.f32.mrf.mxu0
  %v1218 = vadd.f32 %v897, %v1217
  %v1219 = vpop.f32.mrf.mxu0
  %1220 = vmatprep.mubr.f32.mxu0 0.0
  %1221 = vmatmul.mubr.f32.gmra.mxu0 %v1035
  %v1222 = vpop.f32.mrf.mxu0
  %v1223 = vadd.f32 %v902, %v1222
  %v1224 = vpop.f32.mrf.mxu0
  %1225 = vmatprep.mubr.f32.mxu0 0.0
  %1226 = vmatmul.mubr.f32.gmra.mxu0 %v1038
  %v1227 = vpop.f32.mrf.mxu0
  %v1228 = vadd.f32 %v907, %v1227
  %v1229 = vpop.f32.mrf.mxu0
  %1230 = vmatprep.mubr.f32.mxu0 0.0
  %1231 = vmatmul.mubr.f32.gmra.mxu0 %v1041
  %v1232 = vpop.f32.mrf.mxu0
  %v1233 = vadd.f32 %v912, %v1232
  %v1234 = vpop.f32.mrf.mxu0
  %1235 = vmatprep.mubr.f32.mxu0 0.0
  %1236 = vmatmul.mubr.f32.gmra.mxu0 %v1044
  %v1237 = vpop.f32.mrf.mxu0
  %v1238 = vadd.f32 %v917, %v1237
  %v1239 = vpop.f32.mrf.mxu0
  %1240 = vmatprep.mubr.f32.mxu0 0.0
  %1241 = vmatmul.mubr.f32.gmra.mxu0 %v1047
  %v1242 = vpop.f32.mrf.mxu0
  %v1243 = vadd.f32 %v922, %v1242
  %v1244 = vpop.f32.mrf.mxu0
  %1245 = vmatprep.mubr.f32.mxu0 0.0
  %1246 = vmatmul.mubr.f32.gmra.mxu0 %v1050
  %v1247 = vpop.f32.mrf.mxu0
  %v1248 = vadd.f32 %v927, %v1247
  %v1249 = vpop.f32.mrf.mxu0
  %1250 = vmatprep.mubr.f32.mxu0 0.0
  %1251 = vmatmul.mubr.f32.gmra.mxu0 %v1053
  %v1252 = vpop.f32.mrf.mxu0
  %v1253 = vadd.f32 %v932, %v1252
  %v1254 = vpop.f32.mrf.mxu0
  %1255 = vmatprep.mubr.f32.mxu0 0.0
  %1256 = vmatmul.mubr.f32.gmra.mxu0 %v1056
  %v1257 = vpop.f32.mrf.mxu0
  %v1258 = vadd.f32 %v937, %v1257
  %v1259 = vpop.f32.mrf.mxu0
  %1260 = vmatprep.mubr.f32.mxu0 0.0
  %1261 = vmatmul.mubr.f32.gmra.mxu0 %v1059
  %v1262 = vpop.f32.mrf.mxu0
  %v1263 = vadd.f32 %v942, %v1262
  %v1264 = vpop.f32.mrf.mxu0
  %1265 = vmatprep.mubr.f32.mxu0 0.0
  %1266 = vmatmul.mubr.f32.gmra.mxu0 %v1062
  %v1267 = vpop.f32.mrf.mxu0
  %v1268 = vadd.f32 %v947, %v1267
  %v1269 = vpop.f32.mrf.mxu0
  %1270 = vmatprep.mubr.f32.mxu0 0.0
  %1271 = vmatmul.mubr.f32.gmra.mxu0 %v1065
  %v1272 = vpop.f32.mrf.mxu0
  %v1273 = vadd.f32 %v952, %v1272
  %v1274 = vpop.f32.mrf.mxu0
  %1275 = vmatprep.mubr.f32.mxu0 0.0
  %1276 = vmatmul.mubr.f32.gmra.mxu0 %v1068
  %v1277 = vpop.f32.mrf.mxu0
  %v1278 = vadd.f32 %v957, %v1277
  %v1279 = vpop.f32.mrf.mxu0
  %1280 = vmatprep.mubr.f32.mxu0 0.0
  %1281 = vmatmul.mubr.f32.gmra.mxu0 %v1071
  %v1282 = vpop.f32.mrf.mxu0
  %v1283 = vadd.f32 %v962, %v1282
  %v1284 = vpop.f32.mrf.mxu0
  %1285 = vmatprep.mubr.f32.mxu0 0.0
  %1286 = vmatmul.mubr.f32.gmra.mxu0 %v1074
  %v1287 = vpop.f32.mrf.mxu0
  %v1288 = vadd.f32 %v967, %v1287
  %v1289 = vpop.f32.mrf.mxu0
  %1290 = vmatprep.mubr.f32.mxu0 0.0
  %1291 = vmatmul.mubr.f32.gmra.mxu0 %v1077
  %v1292 = vpop.f32.mrf.mxu0
  %v1293 = vadd.f32 %v972, %v1292
  %v1294 = vpop.f32.mrf.mxu0
  %1295 = vmatprep.mubr.f32.mxu0 0.0
  %1296 = vmatmul.mubr.f32.gmra.mxu0 %v1080
  %v1297 = vpop.f32.mrf.mxu0
  %v1298 = vadd.f32 %v977, %v1297
  %v1299 = vpop.f32.mrf.mxu0
  %1300 = vmatprep.mubr.f32.mxu0 0.0
  %1301 = vmatmul.mubr.f32.gmra.mxu0 %v1083
  %v1302 = vpop.f32.mrf.mxu0
  %v1303 = vadd.f32 %v982, %v1302
  %v1304 = vpop.f32.mrf.mxu0
  %1305 = vmatprep.mubr.f32.mxu0 0.0
  %1306 = vmatmul.mubr.f32.gmra.mxu0 %v1086
  %v1307 = vpop.f32.mrf.mxu0
  %v1308 = vadd.f32 %v987, %v1307
  %v1309 = vpop.f32.mrf.mxu0
  %1310 = vmatprep.mubr.f32.mxu0 0.0
  %1311 = vmatmul.mubr.f32.gmra.mxu0 %v1089
  %v1312 = vpop.f32.mrf.mxu0
  %v1313 = vadd.f32 %v992, %v1312
  %v1314 = vpop.f32.mrf.mxu0
  %1315 = vdwg.mxu0
  %v1316 = vrot.slane %v14, 1
  %v1317 = vrot.slane %v15, 1
  %v1318 = vrot.slane %v16, 1
  %v1319 = vrot.slane %v17, 1
  %v1320 = vrot.slane %v18, 1
  %v1321 = vrot.slane %v19, 1
  %v1322 = vrot.slane %v20, 1
  %v1323 = vrot.slane %v21, 1
  %v1324 = vrot.slane %v22, 1
  %v1325 = vrot.slane %v23, 1
  %v1326 = vrot.slane %v24, 1
  %v1327 = vrot.slane %v25, 1
  %v1328 = vrot.slane %v26, 1
  %v1329 = vrot.slane %v27, 1
  %v1330 = vrot.slane %v28, 1
  %v1331 = vrot.slane %v29, 1
  %v1332 = vrot.slane %v30, 1
  %v1333 = vrot.slane %v31, 1
  %v1334 = vrot.slane %v32, 1
  %v1335 = vrot.slane %v33, 1
  %v1336 = vrot.slane %v34, 1
  %v1337 = vrot.slane %v35, 1
  %v1338 = vrot.slane %v36, 1
  %v1339 = vrot.slane %v37, 1
  %v1340 = vrot.slane %v38, 1
  %v1341 = vrot.slane %v39, 1
  %v1342 = vrot.slane %v40, 1
  %v1343 = vrot.slane %v41, 1
  %v1344 = vrot.slane %v42, 1
  %v1345 = vrot.slane %v43, 1
  %v1346 = vrot.slane %v44, 1
  %v1347 = vrot.slane %v45, 1
  %vm1348 = vcmp.lt.s32.totalorder %v47, 7
  %v1349 = vsel %vm1348, %v1346, %v1347
  %v1350 = vsel %vm1348, %v1345, %v1346
  %v1351 = vsel %vm1348, %v1344, %v1345
  %v1352 = vsel %vm1348, %v1343, %v1344
  %v1353 = vsel %vm1348, %v1342, %v1343
  %v1354 = vsel %vm1348, %v1341, %v1342
  %v1355 = vsel %vm1348, %v1340, %v1341
  %v1356 = vsel %vm1348, %v1339, %v1340
  %v1357 = vsel %vm1348, %v1338, %v1339
  %v1358 = vsel %vm1348, %v1337, %v1338
  %v1359 = vsel %vm1348, %v1336, %v1337
  %v1360 = vsel %vm1348, %v1335, %v1336
  %v1361 = vsel %vm1348, %v1334, %v1335
  %v1362 = vsel %vm1348, %v1333, %v1334
  %v1363 = vsel %vm1348, %v1332, %v1333
  %v1364 = vsel %vm1348, %v1331, %v1332
  %v1365 = vsel %vm1348, %v1330, %v1331
  %v1366 = vsel %vm1348, %v1329, %v1330
  %v1367 = vsel %vm1348, %v1328, %v1329
  %v1368 = vsel %vm1348, %v1327, %v1328
  %v1369 = vsel %vm1348, %v1326, %v1327
  %v1370 = vsel %vm1348, %v1325, %v1326
  %v1371 = vsel %vm1348, %v1324, %v1325
  %v1372 = vsel %vm1348, %v1323, %v1324
  %v1373 = vsel %vm1348, %v1322, %v1323
  %v1374 = vsel %vm1348, %v1321, %v1322
  %v1375 = vsel %vm1348, %v1320, %v1321
  %v1376 = vsel %vm1348, %v1319, %v1320
  %v1377 = vsel %vm1348, %v1318, %v1319
  %v1378 = vsel %vm1348, %v1317, %v1318
  %v1379 = vsel %vm1348, %v1316, %v1317
  %v1380 = vsel %vm1348, %v1347, %v1316
  %vm1381 = vcmp.ne.s32.totalorder %v431, 15
  %vm1382 = vcmp.ne.s32.totalorder %v432, 15
  %vm1383 = vcmp.ne.s32.totalorder %v433, 15
  %vm1384 = vcmp.ne.s32.totalorder %v434, 15
  %vm1385 = vcmp.ne.s32.totalorder %v435, 15
  %vm1386 = vcmp.ne.s32.totalorder %v436, 15
  %vm1387 = vcmp.ne.s32.totalorder %v437, 15
  %vm1388 = vcmp.ne.s32.totalorder %v438, 15
  %vm1389 = vcmp.ne.s32.totalorder %v439, 15
  %vm1390 = vcmp.ne.s32.totalorder %v440, 15
  %vm1391 = vcmp.ne.s32.totalorder %v441, 15
  %vm1392 = vcmp.ne.s32.totalorder %v442, 15
  %vm1393 = vcmp.ne.s32.totalorder %v443, 15
  %vm1394 = vcmp.ne.s32.totalorder %v444, 15
  %vm1395 = vcmp.ne.s32.totalorder %v445, 15
  %vm1396 = vcmp.ne.s32.totalorder %v446, 15
  %vm1397 = vcmp.ne.s32.totalorder %v447, 15
  %vm1398 = vcmp.ne.s32.totalorder %v448, 15
  %vm1399 = vcmp.ne.s32.totalorder %v449, 15
  %vm1400 = vcmp.ne.s32.totalorder %v450, 15
  %vm1401 = vcmp.ne.s32.totalorder %v451, 15
  %vm1402 = vcmp.ne.s32.totalorder %v452, 15
  %vm1403 = vcmp.ne.s32.totalorder %v453, 15
  %vm1404 = vcmp.ne.s32.totalorder %v454, 15
  %vm1405 = vcmp.ne.s32.totalorder %v455, 15
  %vm1406 = vcmp.ne.s32.totalorder %v456, 15
  %vm1407 = vcmp.ne.s32.totalorder %v457, 15
  %vm1408 = vcmp.ne.s32.totalorder %v458, 15
  %vm1409 = vcmp.ne.s32.totalorder %v459, 15
  %vm1410 = vcmp.ne.s32.totalorder %v460, 15
  %vm1411 = vcmp.ne.s32.totalorder %v461, 15
  %vm1412 = vcmp.ne.s32.totalorder %v462, 15
  %v1413 = vsel %vm1381, 1, 0
  %v1414 = vsel %vm1382, 1, 0
  %v1415 = vsel %vm1383, 1, 0
  %v1416 = vsel %vm1384, 1, 0
  %v1417 = vsel %vm1385, 1, 0
  %v1418 = vsel %vm1386, 1, 0
  %v1419 = vsel %vm1387, 1, 0
  %v1420 = vsel %vm1388, 1, 0
  %v1421 = vsel %vm1389, 1, 0
  %v1422 = vsel %vm1390, 1, 0
  %v1423 = vsel %vm1391, 1, 0
  %v1424 = vsel %vm1392, 1, 0
  %v1425 = vsel %vm1393, 1, 0
  %v1426 = vsel %vm1394, 1, 0
  %v1427 = vsel %vm1395, 1, 0
  %v1428 = vsel %vm1396, 1, 0
  %v1429 = vsel %vm1397, 1, 0
  %v1430 = vsel %vm1398, 1, 0
  %v1431 = vsel %vm1399, 1, 0
  %v1432 = vsel %vm1400, 1, 0
  %v1433 = vsel %vm1401, 1, 0
  %v1434 = vsel %vm1402, 1, 0
  %v1435 = vsel %vm1403, 1, 0
  %v1436 = vsel %vm1404, 1, 0
  %v1437 = vsel %vm1405, 1, 0
  %v1438 = vsel %vm1406, 1, 0
  %v1439 = vsel %vm1407, 1, 0
  %v1440 = vsel %vm1408, 1, 0
  %v1441 = vsel %vm1409, 1, 0
  %v1442 = vsel %vm1410, 1, 0
  %v1443 = vsel %vm1411, 1, 0
  %v1444 = vsel %vm1412, 1, 0
  %v1445 = vcvt.s32.f32 %v1413
  %v1446 = vcvt.s32.f32 %v1414
  %v1447 = vcvt.s32.f32 %v1415
  %v1448 = vcvt.s32.f32 %v1416
  %v1449 = vcvt.s32.f32 %v1417
  %v1450 = vcvt.s32.f32 %v1418
  %v1451 = vcvt.s32.f32 %v1419
  %v1452 = vcvt.s32.f32 %v1420
  %v1453 = vcvt.s32.f32 %v1421
  %v1454 = vcvt.s32.f32 %v1422
  %v1455 = vcvt.s32.f32 %v1423
  %v1456 = vcvt.s32.f32 %v1424
  %v1457 = vcvt.s32.f32 %v1425
  %v1458 = vcvt.s32.f32 %v1426
  %v1459 = vcvt.s32.f32 %v1427
  %v1460 = vcvt.s32.f32 %v1428
  %v1461 = vcvt.s32.f32 %v1429
  %v1462 = vcvt.s32.f32 %v1430
  %v1463 = vcvt.s32.f32 %v1431
  %v1464 = vcvt.s32.f32 %v1432
  %v1465 = vcvt.s32.f32 %v1433
  %v1466 = vcvt.s32.f32 %v1434
  %v1467 = vcvt.s32.f32 %v1435
  %v1468 = vcvt.s32.f32 %v1436
  %v1469 = vcvt.s32.f32 %v1437
  %v1470 = vcvt.s32.f32 %v1438
  %v1471 = vcvt.s32.f32 %v1439
  %v1472 = vcvt.s32.f32 %v1440
  %v1473 = vcvt.s32.f32 %v1441
  %v1474 = vcvt.s32.f32 %v1442
  %v1475 = vcvt.s32.f32 %v1443
  %v1476 = vcvt.s32.f32 %v1444
  %v1477 = vmul.f32 %v1379, %v1445
  %v1478 = vmul.f32 %v1378, %v1446
  %v1479 = vmul.f32 %v1377, %v1447
  %v1480 = vmul.f32 %v1376, %v1448
  %v1481 = vmul.f32 %v1375, %v1449
  %v1482 = vmul.f32 %v1374, %v1450
  %v1483 = vmul.f32 %v1373, %v1451
  %v1484 = vmul.f32 %v1372, %v1452
  %v1485 = vmul.f32 %v1371, %v1453
  %v1486 = vmul.f32 %v1370, %v1454
  %v1487 = vmul.f32 %v1369, %v1455
  %v1488 = vmul.f32 %v1368, %v1456
  %v1489 = vmul.f32 %v1367, %v1457
  %v1490 = vmul.f32 %v1366, %v1458
  %v1491 = vmul.f32 %v1365, %v1459
  %v1492 = vmul.f32 %v1364, %v1460
  %v1493 = vmul.f32 %v1363, %v1461
  %v1494 = vmul.f32 %v1362, %v1462
  %v1495 = vmul.f32 %v1361, %v1463
  %v1496 = vmul.f32 %v1360, %v1464
  %v1497 = vmul.f32 %v1359, %v1465
  %v1498 = vmul.f32 %v1358, %v1466
  %v1499 = vmul.f32 %v1357, %v1467
  %v1500 = vmul.f32 %v1356, %v1468
  %v1501 = vmul.f32 %v1355, %v1469
  %v1502 = vmul.f32 %v1354, %v1470
  %v1503 = vmul.f32 %v1353, %v1471
  %v1504 = vmul.f32 %v1352, %v1472
  %v1505 = vmul.f32 %v1351, %v1473
  %v1506 = vmul.f32 %v1350, %v1474
  %v1507 = vmul.f32 %v1349, %v1475
  %v1508 = vmul.f32 %v1380, %v1476
  %s1509 = scalar_lea.vmem %s1, 128
  %v1510 = vld [vmem:[%s1509] sm:$0xff]
  %v1511 = vld [vmem:[%s1509 + $0x8] sm:$0xff]
  %v1512 = vld [vmem:[%s1509 + $0x10] sm:$0xff]
  %v1513 = vld [vmem:[%s1509 + $0x18] sm:$0xff]
  %v1514 = vld [vmem:[%s1509 + $0x20] sm:$0xff]
  %v1515 = vld [vmem:[%s1509 + $0x28] sm:$0xff]
  %v1516 = vld [vmem:[%s1509 + $0x30] sm:$0xff]
  %v1517 = vld [vmem:[%s1509 + $0x38] sm:$0xff]
  %v1519 = vsel %vm673, %v1477, 0
  %v1522 = vsel %vm673, %v1478, 0
  %v1525 = vsel %vm673, %v1479, 0
  %v1528 = vsel %vm673, %v1480, 0
  %v1531 = vsel %vm673, %v1481, 0
  %v1534 = vsel %vm673, %v1482, 0
  %v1537 = vsel %vm673, %v1483, 0
  %v1540 = vsel %vm673, %v1484, 0
  %v1543 = vsel %vm673, %v1485, 0
  %v1546 = vsel %vm673, %v1486, 0
  %v1549 = vsel %vm673, %v1487, 0
  %v1552 = vsel %vm673, %v1488, 0
  %v1555 = vsel %vm673, %v1489, 0
  %v1558 = vsel %vm673, %v1490, 0
  %v1561 = vsel %vm673, %v1491, 0
  %v1564 = vsel %vm673, %v1492, 0
  %v1567 = vsel %vm673, %v1493, 0
  %v1570 = vsel %vm673, %v1494, 0
  %v1573 = vsel %vm673, %v1495, 0
  %v1576 = vsel %vm673, %v1496, 0
  %v1579 = vsel %vm673, %v1497, 0
  %v1582 = vsel %vm673, %v1498, 0
  %v1585 = vsel %vm673, %v1499, 0
  %v1588 = vsel %vm673, %v1500, 0
  %v1591 = vsel %vm673, %v1501, 0
  %v1594 = vsel %vm673, %v1502, 0
  %v1597 = vsel %vm673, %v1503, 0
  %v1600 = vsel %vm673, %v1504, 0
  %v1603 = vsel %vm673, %v1505, 0
  %v1606 = vsel %vm673, %v1506, 0
  %v1609 = vsel %vm673, %v1507, 0
  %v1612 = vsel %vm673, %v1508, 0
  %1614 = vmatprep.subr.mxu0 0.0
  %1615 = vmatpush1.msra.mxu0 0.0
  %1616 = vmatprep.subr.mxu0 0.0
  %1617 = vmatpush1.msra.mxu0 0.0
  %1618 = vmatprep.subr.mxu0 0.0
  %1619 = vmatpush1.msra.mxu0 0.0
  %1620 = vmatprep.subr.mxu0 0.0
  %1621 = vmatpush1.msra.mxu0 0.0
  %1622 = vmatprep.subr.mxu0 0.0
  %1623 = vmatpush1.msra.mxu0 0.0
  %1624 = vmatprep.subr.mxu0 0.0
  %1625 = vmatpush1.msra.mxu0 0.0
  %1626 = vmatprep.subr.mxu0 0.0
  %1627 = vmatpush1.msra.mxu0 0.0
  %1628 = vmatprep.subr.mxu0 0.0
  %1629 = vmatpush1.msra.mxu0 0.0
  %1630 = vmatprep.subr.mxu0 0.0
  %1631 = vmatpush1.msra.mxu0 %v1517
  %1632 = vmatprep.subr.mxu0 0.0
  %1633 = vmatpush1.msra.mxu0 %v1516
  %1634 = vmatprep.subr.mxu0 0.0
  %1635 = vmatpush1.msra.mxu0 %v1515
  %1636 = vmatprep.subr.mxu0 0.0
  %1637 = vmatpush1.msra.mxu0 %v1514
  %1638 = vmatprep.subr.mxu0 0.0
  %1639 = vmatpush1.msra.mxu0 %v1513
  %1640 = vmatprep.subr.mxu0 0.0
  %1641 = vmatpush1.msra.mxu0 %v1512
  %1642 = vmatprep.subr.mxu0 0.0
  %1643 = vmatpush1.msra.mxu0 %v1511
  %1644 = vmatprep.subr.mxu0 0.0
  %1645 = vmatpush1.msra.mxu0 %v1510
  %1646 = vmatprep.subr.mxu0 0.0
  %1647 = vmatpush2.msra.mxu0 0.0
  %1648 = vmatprep.subr.mxu0 0.0
  %1649 = vmatpush2.msra.mxu0 0.0
  %1650 = vmatprep.subr.mxu0 0.0
  %1651 = vmatpush2.msra.mxu0 0.0
  %1652 = vmatprep.subr.mxu0 0.0
  %1653 = vmatpush2.msra.mxu0 0.0
  %1654 = vmatprep.subr.mxu0 0.0
  %1655 = vmatpush2.msra.mxu0 0.0
  %1656 = vmatprep.subr.mxu0 0.0
  %1657 = vmatpush2.msra.mxu0 0.0
  %1658 = vmatprep.subr.mxu0 0.0
  %1659 = vmatpush2.msra.mxu0 0.0
  %1660 = vmatprep.subr.mxu0 0.0
  %1661 = vmatpush2.msra.mxu0 0.0
  %1662 = vmatprep.subr.mxu0 0.0
  %1663 = vmatpush2.msra.mxu0 0.0
  %1664 = vmatprep.subr.mxu0 0.0
  %1665 = vmatpush2.msra.mxu0 0.0
  %1666 = vmatprep.subr.mxu0 0.0
  %1667 = vmatpush2.msra.mxu0 0.0
  %1668 = vmatprep.subr.mxu0 0.0
  %1669 = vmatpush2.msra.mxu0 0.0
  %1670 = vmatprep.subr.mxu0 0.0
  %1671 = vmatpush2.msra.mxu0 0.0
  %1672 = vmatprep.subr.mxu0 0.0
  %1673 = vmatpush2.msra.mxu0 0.0
  %1674 = vmatprep.subr.mxu0 0.0
  %1675 = vmatpush2.msra.mxu0 0.0
  %1676 = vmatprep.subr.mxu0 0.0
  %1677 = vmatpush2.msra.mxu0 0.0
  %1678 = vmatprep.mubr.f32.mxu0 0.0
  %1679 = vmatmul.mubr.f32.gmra.mxu0 %v1519
  %v1680 = vpop.f32.mrf.mxu0
  %v1681 = vadd.f32 0.0, %v1680
  %v1682 = vpop.f32.mrf.mxu0
  %1683 = vmatprep.mubr.f32.mxu0 0.0
  %1684 = vmatmul.mubr.f32.gmra.mxu0 %v1522
  %v1685 = vpop.f32.mrf.mxu0
  %v1686 = vadd.f32 0.0, %v1685
  %v1687 = vpop.f32.mrf.mxu0
  %1688 = vmatprep.mubr.f32.mxu0 0.0
  %1689 = vmatmul.mubr.f32.gmra.mxu0 %v1525
  %v1690 = vpop.f32.mrf.mxu0
  %v1691 = vadd.f32 0.0, %v1690
  %v1692 = vpop.f32.mrf.mxu0
  %1693 = vmatprep.mubr.f32.mxu0 0.0
  %1694 = vmatmul.mubr.f32.gmra.mxu0 %v1528
  %v1695 = vpop.f32.mrf.mxu0
  %v1696 = vadd.f32 0.0, %v1695
  %v1697 = vpop.f32.mrf.mxu0
  %1698 = vmatprep.mubr.f32.mxu0 0.0
  %1699 = vmatmul.mubr.f32.gmra.mxu0 %v1531
  %v1700 = vpop.f32.mrf.mxu0
  %v1701 = vadd.f32 0.0, %v1700
  %v1702 = vpop.f32.mrf.mxu0
  %1703 = vmatprep.mubr.f32.mxu0 0.0
  %1704 = vmatmul.mubr.f32.gmra.mxu0 %v1534
  %v1705 = vpop.f32.mrf.mxu0
  %v1706 = vadd.f32 0.0, %v1705
  %v1707 = vpop.f32.mrf.mxu0
  %1708 = vmatprep.mubr.f32.mxu0 0.0
  %1709 = vmatmul.mubr.f32.gmra.mxu0 %v1537
  %v1710 = vpop.f32.mrf.mxu0
  %v1711 = vadd.f32 0.0, %v1710
  %v1712 = vpop.f32.mrf.mxu0
  %1713 = vmatprep.mubr.f32.mxu0 0.0
  %1714 = vmatmul.mubr.f32.gmra.mxu0 %v1540
  %v1715 = vpop.f32.mrf.mxu0
  %v1716 = vadd.f32 0.0, %v1715
  %v1717 = vpop.f32.mrf.mxu0
  %1718 = vmatprep.mubr.f32.mxu0 0.0
  %1719 = vmatmul.mubr.f32.gmra.mxu0 %v1543
  %v1720 = vpop.f32.mrf.mxu0
  %v1721 = vadd.f32 0.0, %v1720
  %v1722 = vpop.f32.mrf.mxu0
  %1723 = vmatprep.mubr.f32.mxu0 0.0
  %1724 = vmatmul.mubr.f32.gmra.mxu0 %v1546
  %v1725 = vpop.f32.mrf.mxu0
  %v1726 = vadd.f32 0.0, %v1725
  %v1727 = vpop.f32.mrf.mxu0
  %1728 = vmatprep.mubr.f32.mxu0 0.0
  %1729 = vmatmul.mubr.f32.gmra.mxu0 %v1549
  %v1730 = vpop.f32.mrf.mxu0
  %v1731 = vadd.f32 0.0, %v1730
  %v1732 = vpop.f32.mrf.mxu0
  %1733 = vmatprep.mubr.f32.mxu0 0.0
  %1734 = vmatmul.mubr.f32.gmra.mxu0 %v1552
  %v1735 = vpop.f32.mrf.mxu0
  %v1736 = vadd.f32 0.0, %v1735
  %v1737 = vpop.f32.mrf.mxu0
  %1738 = vmatprep.mubr.f32.mxu0 0.0
  %1739 = vmatmul.mubr.f32.gmra.mxu0 %v1555
  %v1740 = vpop.f32.mrf.mxu0
  %v1741 = vadd.f32 0.0, %v1740
  %v1742 = vpop.f32.mrf.mxu0
  %1743 = vmatprep.mubr.f32.mxu0 0.0
  %1744 = vmatmul.mubr.f32.gmra.mxu0 %v1558
  %v1745 = vpop.f32.mrf.mxu0
  %v1746 = vadd.f32 0.0, %v1745
  %v1747 = vpop.f32.mrf.mxu0
  %1748 = vmatprep.mubr.f32.mxu0 0.0
  %1749 = vmatmul.mubr.f32.gmra.mxu0 %v1561
  %v1750 = vpop.f32.mrf.mxu0
  %v1751 = vadd.f32 0.0, %v1750
  %v1752 = vpop.f32.mrf.mxu0
  %1753 = vmatprep.mubr.f32.mxu0 0.0
  %1754 = vmatmul.mubr.f32.gmra.mxu0 %v1564
  %v1755 = vpop.f32.mrf.mxu0
  %v1756 = vadd.f32 0.0, %v1755
  %v1757 = vpop.f32.mrf.mxu0
  %1758 = vmatprep.mubr.f32.mxu0 0.0
  %1759 = vmatmul.mubr.f32.gmra.mxu0 %v1567
  %v1760 = vpop.f32.mrf.mxu0
  %v1761 = vadd.f32 0.0, %v1760
  %v1762 = vpop.f32.mrf.mxu0
  %1763 = vmatprep.mubr.f32.mxu0 0.0
  %1764 = vmatmul.mubr.f32.gmra.mxu0 %v1570
  %v1765 = vpop.f32.mrf.mxu0
  %v1766 = vadd.f32 0.0, %v1765
  %v1767 = vpop.f32.mrf.mxu0
  %1768 = vmatprep.mubr.f32.mxu0 0.0
  %1769 = vmatmul.mubr.f32.gmra.mxu0 %v1573
  %v1770 = vpop.f32.mrf.mxu0
  %v1771 = vadd.f32 0.0, %v1770
  %v1772 = vpop.f32.mrf.mxu0
  %1773 = vmatprep.mubr.f32.mxu0 0.0
  %1774 = vmatmul.mubr.f32.gmra.mxu0 %v1576
  %v1775 = vpop.f32.mrf.mxu0
  %v1776 = vadd.f32 0.0, %v1775
  %v1777 = vpop.f32.mrf.mxu0
  %1778 = vmatprep.mubr.f32.mxu0 0.0
  %1779 = vmatmul.mubr.f32.gmra.mxu0 %v1579
  %v1780 = vpop.f32.mrf.mxu0
  %v1781 = vadd.f32 0.0, %v1780
  %v1782 = vpop.f32.mrf.mxu0
  %1783 = vmatprep.mubr.f32.mxu0 0.0
  %1784 = vmatmul.mubr.f32.gmra.mxu0 %v1582
  %v1785 = vpop.f32.mrf.mxu0
  %v1786 = vadd.f32 0.0, %v1785
  %v1787 = vpop.f32.mrf.mxu0
  %1788 = vmatprep.mubr.f32.mxu0 0.0
  %1789 = vmatmul.mubr.f32.gmra.mxu0 %v1585
  %v1790 = vpop.f32.mrf.mxu0
  %v1791 = vadd.f32 0.0, %v1790
  %v1792 = vpop.f32.mrf.mxu0
  %1793 = vmatprep.mubr.f32.mxu0 0.0
  %1794 = vmatmul.mubr.f32.gmra.mxu0 %v1588
  %v1795 = vpop.f32.mrf.mxu0
  %v1796 = vadd.f32 0.0, %v1795
  %v1797 = vpop.f32.mrf.mxu0
  %1798 = vmatprep.mubr.f32.mxu0 0.0
  %1799 = vmatmul.mubr.f32.gmra.mxu0 %v1591
  %v1800 = vpop.f32.mrf.mxu0
  %v1801 = vadd.f32 0.0, %v1800
  %v1802 = vpop.f32.mrf.mxu0
  %1803 = vmatprep.mubr.f32.mxu0 0.0
  %1804 = vmatmul.mubr.f32.gmra.mxu0 %v1594
  %v1805 = vpop.f32.mrf.mxu0
  %v1806 = vadd.f32 0.0, %v1805
  %v1807 = vpop.f32.mrf.mxu0
  %1808 = vmatprep.mubr.f32.mxu0 0.0
  %1809 = vmatmul.mubr.f32.gmra.mxu0 %v1597
  %v1810 = vpop.f32.mrf.mxu0
  %v1811 = vadd.f32 0.0, %v1810
  %v1812 = vpop.f32.mrf.mxu0
  %1813 = vmatprep.mubr.f32.mxu0 0.0
  %1814 = vmatmul.mubr.f32.gmra.mxu0 %v1600
  %v1815 = vpop.f32.mrf.mxu0
  %v1816 = vadd.f32 0.0, %v1815
  %v1817 = vpop.f32.mrf.mxu0
  %1818 = vmatprep.mubr.f32.mxu0 0.0
  %1819 = vmatmul.mubr.f32.gmra.mxu0 %v1603
  %v1820 = vpop.f32.mrf.mxu0
  %v1821 = vadd.f32 0.0, %v1820
  %v1822 = vpop.f32.mrf.mxu0
  %1823 = vmatprep.mubr.f32.mxu0 0.0
  %1824 = vmatmul.mubr.f32.gmra.mxu0 %v1606
  %v1825 = vpop.f32.mrf.mxu0
  %v1826 = vadd.f32 0.0, %v1825
  %v1827 = vpop.f32.mrf.mxu0
  %1828 = vmatprep.mubr.f32.mxu0 0.0
  %1829 = vmatmul.mubr.f32.gmra.mxu0 %v1609
  %v1830 = vpop.f32.mrf.mxu0
  %v1831 = vadd.f32 0.0, %v1830
  %v1832 = vpop.f32.mrf.mxu0
  %1833 = vmatprep.mubr.f32.mxu0 0.0
  %1834 = vmatmul.mubr.f32.gmra.mxu0 %v1612
  %v1835 = vpop.f32.mrf.mxu0
  %v1836 = vadd.f32 0.0, %v1835
  %v1837 = vpop.f32.mrf.mxu0
  %1838 = vdwg.mxu0
  %v1839 = vadd.f32 %v1158, %v1681
  %v1840 = vadd.f32 %v1163, %v1686
  %v1841 = vadd.f32 %v1168, %v1691
  %v1842 = vadd.f32 %v1173, %v1696
  %v1843 = vadd.f32 %v1178, %v1701
  %v1844 = vadd.f32 %v1183, %v1706
  %v1845 = vadd.f32 %v1188, %v1711
  %v1846 = vadd.f32 %v1193, %v1716
  %v1847 = vadd.f32 %v1198, %v1721
  %v1848 = vadd.f32 %v1203, %v1726
  %v1849 = vadd.f32 %v1208, %v1731
  %v1850 = vadd.f32 %v1213, %v1736
  %v1851 = vadd.f32 %v1218, %v1741
  %v1852 = vadd.f32 %v1223, %v1746
  %v1853 = vadd.f32 %v1228, %v1751
  %v1854 = vadd.f32 %v1233, %v1756
  %v1855 = vadd.f32 %v1238, %v1761
  %v1856 = vadd.f32 %v1243, %v1766
  %v1857 = vadd.f32 %v1248, %v1771
  %v1858 = vadd.f32 %v1253, %v1776
  %v1859 = vadd.f32 %v1258, %v1781
  %v1860 = vadd.f32 %v1263, %v1786
  %v1861 = vadd.f32 %v1268, %v1791
  %v1862 = vadd.f32 %v1273, %v1796
  %v1863 = vadd.f32 %v1278, %v1801
  %v1864 = vadd.f32 %v1283, %v1806
  %v1865 = vadd.f32 %v1288, %v1811
  %v1866 = vadd.f32 %v1293, %v1816
  %v1867 = vadd.f32 %v1298, %v1821
  %v1868 = vadd.f32 %v1303, %v1826
  %v1869 = vadd.f32 %v1308, %v1831
  %v1870 = vadd.f32 %v1313, %v1836
  %v1871 = vld [vmem:[%s2] sm:$0x1]
  %v1873 = vlaneseq
  %v1874 = vshrl.u32 %v1873, 7
  %v1875 = vsub.s32 0, %v1874
  %v1876 = vrot.slane %v1871, %v1875
  %v1878 = vadd.f32 %v1839, %v1876
  %v1879 = vadd.f32 %v1840, %v1876
  %v1880 = vadd.f32 %v1841, %v1876
  %v1881 = vadd.f32 %v1842, %v1876
  %v1882 = vadd.f32 %v1843, %v1876
  %v1883 = vadd.f32 %v1844, %v1876
  %v1884 = vadd.f32 %v1845, %v1876
  %v1885 = vadd.f32 %v1846, %v1876
  %v1886 = vadd.f32 %v1847, %v1876
  %v1887 = vadd.f32 %v1848, %v1876
  %v1888 = vadd.f32 %v1849, %v1876
  %v1889 = vadd.f32 %v1850, %v1876
  %v1890 = vadd.f32 %v1851, %v1876
  %v1891 = vadd.f32 %v1852, %v1876
  %v1892 = vadd.f32 %v1853, %v1876
  %v1893 = vadd.f32 %v1854, %v1876
  %v1894 = vadd.f32 %v1855, %v1876
  %v1895 = vadd.f32 %v1856, %v1876
  %v1896 = vadd.f32 %v1857, %v1876
  %v1897 = vadd.f32 %v1858, %v1876
  %v1898 = vadd.f32 %v1859, %v1876
  %v1899 = vadd.f32 %v1860, %v1876
  %v1900 = vadd.f32 %v1861, %v1876
  %v1901 = vadd.f32 %v1862, %v1876
  %v1902 = vadd.f32 %v1863, %v1876
  %v1903 = vadd.f32 %v1864, %v1876
  %v1904 = vadd.f32 %v1865, %v1876
  %v1905 = vadd.f32 %v1866, %v1876
  %v1906 = vadd.f32 %v1867, %v1876
  %v1907 = vadd.f32 %v1868, %v1876
  %v1908 = vadd.f32 %v1869, %v1876
  %v1909 = vadd.f32 %v1870, %v1876
  %1910 = vst [vmem:[%s3] sm:$0xff] %v1878
  %1911 = vst [vmem:[%s3 + $0x8] sm:$0xff] %v1879
  %1912 = vst [vmem:[%s3 + $0x10] sm:$0xff] %v1880
  %1913 = vst [vmem:[%s3 + $0x18] sm:$0xff] %v1881
  %1914 = vst [vmem:[%s3 + $0x20] sm:$0xff] %v1882
  %1915 = vst [vmem:[%s3 + $0x28] sm:$0xff] %v1883
  %1916 = vst [vmem:[%s3 + $0x30] sm:$0xff] %v1884
  %1917 = vst [vmem:[%s3 + $0x38] sm:$0xff] %v1885
  %1918 = vst [vmem:[%s3 + $0x40] sm:$0xff] %v1886
  %1919 = vst [vmem:[%s3 + $0x48] sm:$0xff] %v1887
  %1920 = vst [vmem:[%s3 + $0x50] sm:$0xff] %v1888
  %1921 = vst [vmem:[%s3 + $0x58] sm:$0xff] %v1889
  %1922 = vst [vmem:[%s3 + $0x60] sm:$0xff] %v1890
  %1923 = vst [vmem:[%s3 + $0x68] sm:$0xff] %v1891
  %1924 = vst [vmem:[%s3 + $0x70] sm:$0xff] %v1892
  %1925 = vst [vmem:[%s3 + $0x78] sm:$0xff] %v1893
  %1926 = vst [vmem:[%s3 + $0x80] sm:$0xff] %v1894
  %1927 = vst [vmem:[%s3 + $0x88] sm:$0xff] %v1895
  %1928 = vst [vmem:[%s3 + $0x90] sm:$0xff] %v1896
  %1929 = vst [vmem:[%s3 + $0x98] sm:$0xff] %v1897
  %1930 = vst [vmem:[%s3 + $0xa0] sm:$0xff] %v1898
  %1931 = vst [vmem:[%s3 + $0xa8] sm:$0xff] %v1899
  %1932 = vst [vmem:[%s3 + $0xb0] sm:$0xff] %v1900
  %1933 = vst [vmem:[%s3 + $0xb8] sm:$0xff] %v1901
  %1934 = vst [vmem:[%s3 + $0xc0] sm:$0xff] %v1902
  %1935 = vst [vmem:[%s3 + $0xc8] sm:$0xff] %v1903
  %1936 = vst [vmem:[%s3 + $0xd0] sm:$0xff] %v1904
  %1937 = vst [vmem:[%s3 + $0xd8] sm:$0xff] %v1905
  %1938 = vst [vmem:[%s3 + $0xe0] sm:$0xff] %v1906
  %1939 = vst [vmem:[%s3 + $0xe8] sm:$0xff] %v1907
  %1940 = vst [vmem:[%s3 + $0xf0] sm:$0xff] %v1908
  %1941 = vst [vmem:[%s3 + $0xf8] sm:$0xff] %v1909
  // Predicated region
  $region14: #{seq_to_ann_container.1} parent=0 // pred_check
    _
  $region15: #{seq_to_ann_container.1} parent=0 // pred_check_branch
    %1943 = sbr.rel (0) target = $region17
  $region16: #{seq_to_ann_container.1} parent=0 // pred_region
    _
  $region17: #{seq_to_ann_container.1} parent=0 // pred_fallthru
    _
  // Predicated region
  $region18: #{seq_to_ann_container.1} parent=0 // pred_check
    _
  $region19: #{seq_to_ann_container.1} parent=0 // pred_check_branch
    %1945 = sbr.rel (0) target = $region21
  $region20: #{seq_to_ann_container.1} parent=0 // pred_region
    _
  $region21: #{seq_to_ann_container.1} parent=0 // pred_fallthru
    _

</llo_original>
